<compile_context>
chip_gen: v6e
topology: v6e:2x2x1
jax: 0.10.0
libtpu: 0.0.40
codegen_flags: <defaults>
</compile_context>

<pallas_src>
import functools

import jax
import jax.numpy as jnp
from jax.experimental import pallas as pl
from jax.experimental.pallas import tpu as pltpu

LANE = 128
ROW_ALIGN = 16  # bf16 packs 16 rows per vreg


def _round_up(n, m):
    return ((n + m - 1) // m) * m


def _activation_fn(name):
    if name == "relu":
        return lambda x: jnp.maximum(x, 0.0)
    elif name == "tanh":
        return jnp.tanh
    elif name == "sigmoid":
        return jax.nn.sigmoid
    else:
        raise ValueError(f"Unsupported activation: {name}")


def _nbytes(shape, dt):
    n = 1
    for s in shape:
        n *= s
    return n * jnp.dtype(dt).itemsize


def _tpu_vmem_and_cores():
    """(physical VMEM bytes per core, TensorCores per chip) with safe fallbacks."""
    vmem_cap = None
    num_cores = None
    try:
        info = pltpu.get_tpu_info()
        vmem_cap = int(info.vmem_capacity_bytes)
        nc = getattr(info, "tensorcores_per_chip", None)
        if nc is None:
            nc = getattr(info, "num_cores", None)
        if isinstance(nc, int) and 1 <= nc <= 8:
            num_cores = nc
    except Exception:
        pass
    if vmem_cap is None or vmem_cap <= 0:
        vmem_cap = 64 << 20  # conservative (v7x per-TC)
    if num_cores is None:
        # Heuristic: v7x exposes 64 MiB VMEM/TC and has 2 TCs/chip;
        # v5e/v6e expose 128 MiB and have 1 TC/chip.
        num_cores = 2 if vmem_cap <= (64 << 20) else 1
    return vmem_cap, num_cores


def _mlp_kernel(*refs, num_layers, activation, compute_dtype):
    """refs = (x_ref, w0, ..., wL-1, b_packed_ref, out_ref)."""
    x_ref = refs[0]
    w_refs = refs[1:1 + num_layers]
    b_ref = refs[1 + num_layers]
    out_ref = refs[2 + num_layers]
    act = _activation_fn(activation)

    # f32 -> bf16 cast happens here (not in the wrapper).
    h = x_ref[...].astype(compute_dtype)
    for layer in range(num_layers):
        w = w_refs[layer][...]          # bf16 [K, pn] (K unpadded for layer 0)
        pn = w.shape[1]
        h = jnp.dot(h, w, preferred_element_type=jnp.float32)   # MXU, f32 acc
        h = h + b_ref[layer:layer + 1, :pn].astype(jnp.float32)
        if layer < num_layers - 1:      # no activation after the final Linear
            # bf16 inter-layer intermediates (same cast point as the reference).
            h = act(h).astype(compute_dtype)
    out_ref[...] = h.astype(out_ref.dtype)


def _pad_params(params, compute_dtype):
    """Zero-pad weights: N dims (and K dims of layers >= 1) to 128 lanes.

    Layer 0's K dim stays equal to in_dim (x is not lane-padded).
    Biases are packed into a single [L, max_padded_out] array.
    """
    out_padded = [_round_up(w.shape[1], LANE) for (w, _) in params]
    max_pn = max(out_padded)
    ws = []
    for i, (w, _) in enumerate(params):
        k, n = w.shape
        pk = k if i == 0 else _round_up(k, LANE)
        pn = out_padded[i]
        w_p = jnp.zeros((pk, pn), compute_dtype).at[:k, :n].set(
            w.astype(compute_dtype))
        ws.append(w_p)
    b_packed = jnp.zeros((len(params), max_pn), compute_dtype)
    for i, (_, b) in enumerate(params):
        n = b.shape[-1]
        b_packed = b_packed.at[i, :n].set(b.reshape(-1).astype(compute_dtype))
    return ws, b_packed, out_padded, max_pn


def dynamic_aerodynamic_dnn_forward(
    x, params, *, activation="relu", batch_tile=None,
    compute_dtype=jnp.bfloat16, out_dtype=jnp.float32,
):
    """x: [B, input_dim] float32.  params: list of (W[in,out], b[1,out])."""
    B, in_dim = x.shape
    num_layers = len(params)
    out_dim = params[-1][0].shape[1]

    ws, b_packed, out_padded, max_pn = _pad_params(params, compute_dtype)
    padded_out = out_padded[-1]
    param_bytes = sum(_nbytes(w.shape, compute_dtype) for w in ws) \
        + _nbytes(b_packed.shape, compute_dtype)

    # ---- generation-aware VMEM budget ----
    vmem_cap, num_cores = _tpu_vmem_and_cores()
    # ~56 MiB usable on v7x (64 MiB physical), ~112 MiB on v5e/v6e (128 MiB).
    usable = min(vmem_cap - (8 << 20), (vmem_cap * 7) // 8)
    usable = max(usable, 16 << 20)

    # TODO(synk): if param_bytes ever exceeds ~50% of usable VMEM (very wide
    # hidden layers, esp. on v7x), stream weights over an extra N/K grid axis
    # (or an in-kernel emit_pipeline) instead of keeping them fully resident.

    # ---- generation-aware batch tile (16-row aligned for bf16 packing) ----
    B16 = _round_up(B, ROW_ALIGN)
    if batch_tile is not None:
        bt = _round_up(max(ROW_ALIGN, min(batch_tile, B16)), ROW_ALIGN)
    elif num_cores >= 2:
        # v7x: >= num_cores "parallel" grid steps so both TensorCores get work.
        bt = _round_up(max(ROW_ALIGN, -(-B16 // num_cores)), ROW_ALIGN)
        bt = min(bt, 1024)
    else:
        # v5e/v6e single TC: one big step amortizes the ~0.35us/step overhead.
        bt = min(B16, 2048)

    def _estimate(bt_):
        est = 2 * _nbytes((bt_, in_dim), x.dtype)          # x tile (dbl-buf)
        est += 2 * _nbytes((bt_, padded_out), out_dtype)   # out tile (dbl-buf)
        est += 4 * _nbytes((bt_, max_pn), jnp.float32)     # intermediates
        est += 2 * param_bytes                             # conservative
        return est

    while _estimate(bt) > usable and bt > ROW_ALIGN:
        bt = max(ROW_ALIGN, _round_up(bt // 2, ROW_ALIGN))

    padded_B = _round_up(B, bt)
    grid = (padded_B // bt,)

    # Batch-only padding of x (no feature padding, no dtype cast here).
    if padded_B != B:
        x_p = jnp.zeros((padded_B, in_dim), x.dtype).at[:B].set(x)
    else:
        x_p = x

    vmem_limit = int(min(max(32 << 20, 2 * _estimate(bt)), usable))

    kernel = functools.partial(
        _mlp_kernel, num_layers=num_layers, activation=activation,
        compute_dtype=compute_dtype,
    )

    def _run(use_buffered):
        # Constant-index-map params: single-buffer them when supported.
        param_kwargs = {}
        if use_buffered and hasattr(pl, "Buffered"):
            param_kwargs = dict(pipeline_mode=pl.Buffered(1))

        in_specs = [pl.BlockSpec((bt, in_dim), lambda i: (i, 0))]
        for w in ws:
            in_specs.append(pl.BlockSpec(w.shape, lambda i: (0, 0),
                                         **param_kwargs))
        in_specs.append(pl.BlockSpec(b_packed.shape, lambda i: (0, 0),
                                     **param_kwargs))
        out_spec = pl.BlockSpec((bt, padded_out), lambda i: (i, 0))

        # Note (v7x): with "parallel" + constant weight index maps, each TC
        # fetches its own copy of the (tiny) parameter set -- negligible here.
        return pl.pallas_call(
            kernel,
            out_shape=jax.ShapeDtypeStruct((padded_B, padded_out), out_dtype),
            grid_spec=pltpu.PrefetchScalarGridSpec(
                num_scalar_prefetch=0,
                grid=grid,
                in_specs=in_specs,
                out_specs=out_spec,
            ),
            compiler_params=pltpu.CompilerParams(
                dimension_semantics=("parallel",),
                vmem_limit_bytes=vmem_limit,
            ),
        )(x_p, *ws, b_packed)

    try:
        out = _run(use_buffered=True)
    except Exception:
        # pipeline_mode=pl.Buffered(1) not supported on this JAX/Mosaic build;
        # fall back to default double-buffering (params are small anyway).
        out = _run(use_buffered=False)

    # Lane-dense kernel output -> slice back to the true (B, out_dim) shape.
    return out[:B, :out_dim].astype(jnp.float32)


def init_params(key, input_dim, hidden_units_per_layer, output_units):
    """Deterministic init mirroring the nn.Linear shapes of the PyTorch module.

    Returns list of (W[in, out], b[1, out]) pairs (W already transposed vs
    PyTorch's [out, in] convention).
    """
    dims = [input_dim] + list(hidden_units_per_layer) + [output_units]
    params = []
    for i in range(len(dims) - 1):
        key, kw, kb = jax.random.split(key, 3)
        fan_in = dims[i]
        bound = 1.0 / jnp.sqrt(fan_in)
        w = jax.random.uniform(
            kw, (dims[i], dims[i + 1]), jnp.float32, minval=-bound, maxval=bound
        )
        b = jax.random.uniform(
            kb, (1, dims[i + 1]), jnp.float32, minval=-bound, maxval=bound
        )
        params.append((w, b))
    return params


def reference_forward(x, params, activation="relu", compute_dtype=jnp.bfloat16):
    """Pure-JAX reference doing the same bf16-operand / f32-accum math."""
    act = _activation_fn(activation)
    h = x.astype(compute_dtype)
    for i, (w, b) in enumerate(params):
        h = jnp.dot(h, w.astype(compute_dtype),
                    preferred_element_type=jnp.float32)
        h = h + b.astype(jnp.float32)
        if i < len(params) - 1:
            h = act(h).astype(compute_dtype)
    return h


if __name__ == "__main__":
    # Small shapes consistent with an airfoil-coefficient MLP: 4 input
    # features (AoA, Mach, Reynolds, thickness), 2 hidden layers of 32,
    # 3 outputs (Cl, Cd, Cm).
    input_dim = 4
    hidden_units_per_layer = [32, 32]
    output_units = 3
    activation = "relu"
    batch = 256

    key = jax.random.PRNGKey(0)
    key, kx = jax.random.split(key)
    x = jax.random.normal(kx, (batch, input_dim), dtype=jnp.float32)

    params = init_params(key, input_dim, hidden_units_per_layer, output_units)

    out = dynamic_aerodynamic_dnn_forward(x, params, activation=activation)
    out = jax.block_until_ready(out)

    # Sanity-check against a pure-JAX reference of the same (bf16) math.
    ref = reference_forward(x, params, activation)
    assert out.shape == (batch, output_units)
    assert jnp.allclose(out, ref, atol=5e-3, rtol=5e-3), "mismatch vs reference"

    print("KERNEL_OK")
</pallas_src>

<mosaic_0001>
module attributes {stable_mosaic.version = 11 : i64} {
  func.func @_mlp_kernel(%arg0: i32, %arg1: memref<128x4xf32, #tpu.memory_space<vmem>>, %arg2: memref<4x128xbf16, #tpu.memory_space<vmem>>, %arg3: memref<128x128xbf16, #tpu.memory_space<vmem>>, %arg4: memref<128x128xbf16, #tpu.memory_space<vmem>>, %arg5: memref<3x128xbf16, #tpu.memory_space<vmem>>, %arg6: memref<128x128xf32, #tpu.memory_space<vmem>>) attributes {dimension_semantics = [#tpu.dimension_semantics<parallel>], iteration_bounds = array<i64: 2>, scalar_prefetch = 0 : i64, scratch_operands = 0 : i64, tpu.core_type = #tpu.core_type<tc>, window_params = [{transform_indices = @transform_0, window_bounds = array<i64: 128, 4>}, {pipeline_mode = #tpu.pipeline_mode<synchronous>, transform_indices = @transform_1, window_bounds = array<i64: 4, 128>}, {pipeline_mode = #tpu.pipeline_mode<synchronous>, transform_indices = @transform_2, window_bounds = array<i64: 128, 128>}, {pipeline_mode = #tpu.pipeline_mode<synchronous>, transform_indices = @transform_3, window_bounds = array<i64: 128, 128>}, {pipeline_mode = #tpu.pipeline_mode<synchronous>, transform_indices = @transform_4, window_bounds = array<i64: 3, 128>}, {transform_indices = @transform_5, window_bounds = array<i64: 128, 128>}]} {
    %c0 = arith.constant 0 : index
    %c0_0 = arith.constant 0 : index
    %0 = vector.load %arg1[%c0, %c0_0] : memref<128x4xf32, #tpu.memory_space<vmem>>, vector<128x4xf32>
    %1 = arith.truncf %0 : vector<128x4xf32> to vector<128x4xbf16>
    %c0_1 = arith.constant 0 : index
    %c0_2 = arith.constant 0 : index
    %2 = vector.load %arg2[%c0_1, %c0_2] : memref<4x128xbf16, #tpu.memory_space<vmem>>, vector<4x128xbf16>
    %cst = arith.constant dense<0.000000e+00> : vector<128x128xf32>
    %3 = tpu.matmul %1, %2, %cst {dimension_numbers = #tpu.dot_dimension_numbers<[1], [0], [0], [1], [0, 0, 1, 1], [], []>} : vector<128x4xbf16>, vector<4x128xbf16>, vector<128x128xf32> -> vector<128x128xf32>
    %c0_3 = arith.constant 0 : index
    %c0_4 = arith.constant 0 : index
    %4 = vector.load %arg5[%c0_3, %c0_4] : memref<3x128xbf16, #tpu.memory_space<vmem>>, vector<1x128xbf16>
    %5 = arith.extf %4 : vector<1x128xbf16> to vector<1x128xf32>
    %6 = vector.broadcast %5 : vector<1x128xf32> to vector<128x128xf32>
    %7 = arith.addf %3, %6 : vector<128x128xf32>
    %cst_5 = arith.constant 0.000000e+00 : f32
    %8 = vector.broadcast %cst_5 : f32 to vector<128x128xf32>
    %9 = arith.maximumf %7, %8 : vector<128x128xf32>
    %10 = arith.truncf %9 : vector<128x128xf32> to vector<128x128xbf16>
    %c0_6 = arith.constant 0 : index
    %c0_7 = arith.constant 0 : index
    %11 = vector.load %arg3[%c0_6, %c0_7] : memref<128x128xbf16, #tpu.memory_space<vmem>>, vector<128x128xbf16>
    %cst_8 = arith.constant dense<0.000000e+00> : vector<128x128xf32>
    %12 = tpu.matmul %10, %11, %cst_8 {dimension_numbers = #tpu.dot_dimension_numbers<[1], [0], [0], [1], [0, 0, 1, 1], [], []>} : vector<128x128xbf16>, vector<128x128xbf16>, vector<128x128xf32> -> vector<128x128xf32>
    %c1 = arith.constant 1 : index
    %c0_9 = arith.constant 0 : index
    %13 = vector.load %arg5[%c1, %c0_9] : memref<3x128xbf16, #tpu.memory_space<vmem>>, vector<1x128xbf16>
    %14 = arith.extf %13 : vector<1x128xbf16> to vector<1x128xf32>
    %15 = vector.broadcast %14 : vector<1x128xf32> to vector<128x128xf32>
    %16 = arith.addf %12, %15 : vector<128x128xf32>
    %cst_10 = arith.constant 0.000000e+00 : f32
    %17 = vector.broadcast %cst_10 : f32 to vector<128x128xf32>
    %18 = arith.maximumf %16, %17 : vector<128x128xf32>
    %19 = arith.truncf %18 : vector<128x128xf32> to vector<128x128xbf16>
    %c0_11 = arith.constant 0 : index
    %c0_12 = arith.constant 0 : index
    %20 = vector.load %arg4[%c0_11, %c0_12] : memref<128x128xbf16, #tpu.memory_space<vmem>>, vector<128x128xbf16>
    %cst_13 = arith.constant dense<0.000000e+00> : vector<128x128xf32>
    %21 = tpu.matmul %19, %20, %cst_13 {dimension_numbers = #tpu.dot_dimension_numbers<[1], [0], [0], [1], [0, 0, 1, 1], [], []>} : vector<128x128xbf16>, vector<128x128xbf16>, vector<128x128xf32> -> vector<128x128xf32>
    %c2 = arith.constant 2 : index
    %c0_14 = arith.constant 0 : index
    %22 = vector.load %arg5[%c2, %c0_14] : memref<3x128xbf16, #tpu.memory_space<vmem>>, vector<1x128xbf16>
    %23 = arith.extf %22 : vector<1x128xbf16> to vector<1x128xf32>
    %24 = vector.broadcast %23 : vector<1x128xf32> to vector<128x128xf32>
    %25 = arith.addf %21, %24 : vector<128x128xf32>
    %c0_15 = arith.constant 0 : index
    %c0_16 = arith.constant 0 : index
    %26 = vector.load %arg6[%c0_15, %c0_16] : memref<128x128xf32, #tpu.memory_space<vmem>>, vector<128x128xf32>
    tpu.vector_store %arg6[%c0_15, %c0_16], %25 {strides = array<i32>} : memref<128x128xf32, #tpu.memory_space<vmem>>, vector<128x128xf32>,
    return
  }
  func.func @transform_0(%arg0: i32) -> (i32, i32) {
    %c0_i32 = arith.constant 0 : i32
    %c0_i32_0 = arith.constant 0 : i32
    return %arg0, %c0_i32 : i32, i32
  }
  func.func @transform_1(%arg0: i32) -> (i32, i32) {
    %c0_i32 = arith.constant 0 : i32
    %c0_i32_0 = arith.constant 0 : i32
    %c0_i32_1 = arith.constant 0 : i32
    return %c0_i32, %c0_i32_0 : i32, i32
  }
  func.func @transform_2(%arg0: i32) -> (i32, i32) {
    %c0_i32 = arith.constant 0 : i32
    %c0_i32_0 = arith.constant 0 : i32
    %c0_i32_1 = arith.constant 0 : i32
    return %c0_i32, %c0_i32_0 : i32, i32
  }
  func.func @transform_3(%arg0: i32) -> (i32, i32) {
    %c0_i32 = arith.constant 0 : i32
    %c0_i32_0 = arith.constant 0 : i32
    %c0_i32_1 = arith.constant 0 : i32
    return %c0_i32, %c0_i32_0 : i32, i32
  }
  func.func @transform_4(%arg0: i32) -> (i32, i32) {
    %c0_i32 = arith.constant 0 : i32
    %c0_i32_0 = arith.constant 0 : i32
    %c0_i32_1 = arith.constant 0 : i32
    return %c0_i32, %c0_i32_0 : i32, i32
  }
  func.func @transform_5(%arg0: i32) -> (i32, i32) {
    %c0_i32 = arith.constant 0 : i32
    %c0_i32_0 = arith.constant 0 : i32
    return %arg0, %c0_i32 : i32, i32
  }
}

module attributes {stable_mosaic.version = 11 : i64} {
  func.func @_mlp_kernel(%arg0: i32, %arg1: memref<128x4xf32, #tpu.memory_space<vmem>>, %arg2: memref<4x128xbf16, #tpu.memory_space<vmem>>, %arg3: memref<128x128xbf16, #tpu.memory_space<vmem>>, %arg4: memref<128x128xbf16, #tpu.memory_space<vmem>>, %arg5: memref<3x128xbf16, #tpu.memory_space<vmem>>, %arg6: memref<128x128xf32, #tpu.memory_space<vmem>>) attributes {dimension_semantics = [#tpu.dimension_semantics<parallel>], iteration_bounds = array<i64: 2>, scalar_prefetch = 0 : i64, scratch_operands = 0 : i64, tpu.core_type = #tpu.core_type<tc>, window_params = [{transform_indices = @transform_0, window_bounds = array<i64: 128, 4>}, {pipeline_mode = #tpu.pipeline_mode<synchronous>, transform_indices = @transform_1, window_bounds = array<i64: 4, 128>}, {pipeline_mode = #tpu.pipeline_mode<synchronous>, transform_indices = @transform_2, window_bounds = array<i64: 128, 128>}, {pipeline_mode = #tpu.pipeline_mode<synchronous>, transform_indices = @transform_3, window_bounds = array<i64: 128, 128>}, {pipeline_mode = #tpu.pipeline_mode<synchronous>, transform_indices = @transform_4, window_bounds = array<i64: 3, 128>}, {transform_indices = @transform_5, window_bounds = array<i64: 128, 128>}]} {
    %c0 = arith.constant 0 : index
    %c0_0 = arith.constant 0 : index
    %0 = vector.load %arg1[%c0, %c0_0] : memref<128x4xf32, #tpu.memory_space<vmem>>, vector<128x4xf32>
    %1 = arith.truncf %0 : vector<128x4xf32> to vector<128x4xbf16>
    %c0_1 = arith.constant 0 : index
    %c0_2 = arith.constant 0 : index
    %2 = vector.load %arg2[%c0_1, %c0_2] : memref<4x128xbf16, #tpu.memory_space<vmem>>, vector<4x128xbf16>
    %cst = arith.constant dense<0.000000e+00> : vector<128x128xf32>
    %3 = tpu.matmul %1, %2, %cst {dimension_numbers = #tpu.dot_dimension_numbers<[1], [0], [0], [1], [0, 0, 1, 1], [], []>} : vector<128x4xbf16>, vector<4x128xbf16>, vector<128x128xf32> -> vector<128x128xf32>
    %c0_3 = arith.constant 0 : index
    %c0_4 = arith.constant 0 : index
    %4 = vector.load %arg5[%c0_3, %c0_4] : memref<3x128xbf16, #tpu.memory_space<vmem>>, vector<1x128xbf16>
    %5 = arith.extf %4 : vector<1x128xbf16> to vector<1x128xf32>
    %6 = vector.broadcast %5 : vector<1x128xf32> to vector<128x128xf32>
    %7 = arith.addf %3, %6 : vector<128x128xf32>
    %cst_5 = arith.constant 0.000000e+00 : f32
    %8 = vector.broadcast %cst_5 : f32 to vector<128x128xf32>
    %9 = arith.maximumf %7, %8 : vector<128x128xf32>
    %10 = arith.truncf %9 : vector<128x128xf32> to vector<128x128xbf16>
    %c0_6 = arith.constant 0 : index
    %c0_7 = arith.constant 0 : index
    %11 = vector.load %arg3[%c0_6, %c0_7] : memref<128x128xbf16, #tpu.memory_space<vmem>>, vector<128x128xbf16>
    %cst_8 = arith.constant dense<0.000000e+00> : vector<128x128xf32>
    %12 = tpu.matmul %10, %11, %cst_8 {dimension_numbers = #tpu.dot_dimension_numbers<[1], [0], [0], [1], [0, 0, 1, 1], [], []>} : vector<128x128xbf16>, vector<128x128xbf16>, vector<128x128xf32> -> vector<128x128xf32>
    %c1 = arith.constant 1 : index
    %c0_9 = arith.constant 0 : index
    %13 = vector.load %arg5[%c1, %c0_9] : memref<3x128xbf16, #tpu.memory_space<vmem>>, vector<1x128xbf16>
    %14 = arith.extf %13 : vector<1x128xbf16> to vector<1x128xf32>
    %15 = vector.broadcast %14 : vector<1x128xf32> to vector<128x128xf32>
    %16 = arith.addf %12, %15 : vector<128x128xf32>
    %cst_10 = arith.constant 0.000000e+00 : f32
    %17 = vector.broadcast %cst_10 : f32 to vector<128x128xf32>
    %18 = arith.maximumf %16, %17 : vector<128x128xf32>
    %19 = arith.truncf %18 : vector<128x128xf32> to vector<128x128xbf16>
    %c0_11 = arith.constant 0 : index
    %c0_12 = arith.constant 0 : index
    %20 = vector.load %arg4[%c0_11, %c0_12] : memref<128x128xbf16, #tpu.memory_space<vmem>>, vector<128x128xbf16>
    %cst_13 = arith.constant dense<0.000000e+00> : vector<128x128xf32>
    %21 = tpu.matmul %19, %20, %cst_13 {dimension_numbers = #tpu.dot_dimension_numbers<[1], [0], [0], [1], [0, 0, 1, 1], [], []>} : vector<128x128xbf16>, vector<128x128xbf16>, vector<128x128xf32> -> vector<128x128xf32>
    %c2 = arith.constant 2 : index
    %c0_14 = arith.constant 0 : index
    %22 = vector.load %arg5[%c2, %c0_14] : memref<3x128xbf16, #tpu.memory_space<vmem>>, vector<1x128xbf16>
    %23 = arith.extf %22 : vector<1x128xbf16> to vector<1x128xf32>
    %24 = vector.broadcast %23 : vector<1x128xf32> to vector<128x128xf32>
    %25 = arith.addf %21, %24 : vector<128x128xf32>
    %c0_15 = arith.constant 0 : index
    %c0_16 = arith.constant 0 : index
    %26 = vector.load %arg6[%c0_15, %c0_16] : memref<128x128xf32, #tpu.memory_space<vmem>>, vector<128x128xf32>
    tpu.vector_store %arg6[%c0_15, %c0_16], %25 {strides = array<i32>} : memref<128x128xf32, #tpu.memory_space<vmem>>, vector<128x128xf32>,
    return
  }
  func.func @transform_0(%arg0: i32) -> (i32, i32) {
    %c0_i32 = arith.constant 0 : i32
    %c0_i32_0 = arith.constant 0 : i32
    return %arg0, %c0_i32 : i32, i32
  }
  func.func @transform_1(%arg0: i32) -> (i32, i32) {
    %c0_i32 = arith.constant 0 : i32
    %c0_i32_0 = arith.constant 0 : i32
    %c0_i32_1 = arith.constant 0 : i32
    return %c0_i32, %c0_i32_0 : i32, i32
  }
  func.func @transform_2(%arg0: i32) -> (i32, i32) {
    %c0_i32 = arith.constant 0 : i32
    %c0_i32_0 = arith.constant 0 : i32
    %c0_i32_1 = arith.constant 0 : i32
    return %c0_i32, %c0_i32_0 : i32, i32
  }
  func.func @transform_3(%arg0: i32) -> (i32, i32) {
    %c0_i32 = arith.constant 0 : i32
    %c0_i32_0 = arith.constant 0 : i32
    %c0_i32_1 = arith.constant 0 : i32
    return %c0_i32, %c0_i32_0 : i32, i32
  }
  func.func @transform_4(%arg0: i32) -> (i32, i32) {
    %c0_i32 = arith.constant 0 : i32
    %c0_i32_0 = arith.constant 0 : i32
    %c0_i32_1 = arith.constant 0 : i32
    return %c0_i32, %c0_i32_0 : i32, i32
  }
  func.func @transform_5(%arg0: i32) -> (i32, i32) {
    %c0_i32 = arith.constant 0 : i32
    %c0_i32_0 = arith.constant 0 : i32
    return %arg0, %c0_i32 : i32, i32
  }
}

</mosaic_0001>

<llo_original>
// kernel: tpu_custom_call.1
$region0: #{tpu_custom_call.1}
  #allocation0 [shape = 'u32[]', space=smem, size = 0x4, offset = 0x4, fixed_abs, tag = 'smem constant byte address 0x4 - core index']
  #allocation1 [shape = 'u32[144,128]{1,0:T(1,128)}', space=vmem, size = 0x12000, scoped, tag = 'internal scratch']
  %s0 = inlined_call_operand.vmem [shape: f32[256,4], index: 0, kind: input, shape index: {}]
  %s1 = inlined_call_operand.vmem [shape: bf16[4,128], index: 1, kind: input, shape index: {}]
  %s2 = inlined_call_operand.vmem [shape: bf16[128,128], index: 2, kind: input, shape index: {}]
  %s3 = inlined_call_operand.vmem [shape: bf16[128,128], index: 3, kind: input, shape index: {}]
  %s4 = inlined_call_operand.vmem [shape: bf16[3,128], index: 4, kind: input, shape index: {}]
  %s5 = inlined_call_operand.hbm [shape: f32[256,128], index: 5, kind: output, shape index: {}]
  %s6 = sld [smem:[#allocation0]]
  $region53: #{tpu_custom_call.1} parent=0
    _
  %s8 = ssub.s32 1, %s6
  %s9 = scalar_select 0, %s8, %s6
  $region1: #{tpu_custom_call.1} parent=0
    #allocation2 [shape = 'u8[131072]{0}', space=vmem, size = 0x20000, scoped, tag = 'output window, operand 0']
    #allocation3 [shape = 's32[2]{0}', space=sflag, size = 0x8, scoped, tag = 'scoped memory for tpu_custom_call.1']
    %10 = vsyncpa [#allocation3], 0
    %s11 = scalar_lea.sflag [#allocation3], 1
    %12 = vsyncpa %s11, 0
    loop: start=0, step=1, limit=4
    $region2: #{tpu_custom_call.1} parent=1 // loop_pre_header
      _
    $region3: #{tpu_custom_call.1} parent=1 // loop_header
      %s14 = sphi 0, %s18
      %p15 = scmp.ge.s32.totalorder %s14, 4
      %s24 = sphi 0, %s26
      %s27 = sphi 0, %s24
      %s28 = sphi 0, %s27
      %s44 = sphi 0, %s28
      %s48 = sphi 0, %s48
      %s50 = sphi 0, %s48
      %s51 = sphi 0, %s50
      %s65 = sphi 0, %s51
      %s69 = sphi 0, %s69
      %s71 = sphi 0, %s69
      %s72 = sphi 0, %s71
      %s86 = sphi 0, %s72
      %s90 = sphi 0, %s90
      %s92 = sphi 0, %s90
      %s93 = sphi 0, %s92
      %s107 = sphi 0, %s93
      %s111 = sphi 0, %s111
      %s113 = sphi 0, %s111
      %s114 = sphi 0, %s113
      %s128 = sphi 0, %s114
      %s134 = sphi 0, %s136
      %s137 = sphi 0, %s134
      %s138 = sphi 0, %s137
      %s154 = sphi 0, %s138
    $region4: #{tpu_custom_call.1} parent=1 // loop_header_branch
      %17 = sbr.rel (%p15) target = $region8
    $region5: #{tpu_custom_call.1} parent=1 // loop_body
      %s19 = ssub.s32 %s14, 1
      %s20 = ssub.s32 %s14, 2
      %s21 = sadd.s32 %s14, 1
      %s22 = ssub.s32 %s14, %s21
      %p23 = scmp.eq.s32.totalorder %s22, 0
      %s25 = sadd.s32 %s24, 1
      %s26 = scalar_select %p23, %s24, %s25
      %p29 = pneg %p23
      %p30 = scmp.eq.s32.totalorder %s14, 1
      %p31 = por %p29, %p30
      %p32 = scmp.ne.s32.totalorder %s24, %s27
      %p33 = scmp.eq.s32.totalorder %s14, 0
      %p34 = por %p32, %p33
      %p35 = scmp.ne.s32.totalorder %s24, %s27
      %p36 = scmp.eq.s32.totalorder %s19, 1
      %p37 = por %p35, %p36
      %p38 = scmp.ne.s32.totalorder %s27, %s28
      %p39 = scmp.eq.s32.totalorder %s19, 0
      %p40 = por %p38, %p39
      %p41 = scmp.ne.s32.totalorder %s27, %s28
      %p42 = scmp.eq.s32.totalorder %s20, 1
      %p43 = por %p41, %p42
      %p45 = scmp.ne.s32.totalorder %s28, %s44
      %p46 = scmp.eq.s32.totalorder %s20, 0
      %p47 = por %p45, %p46
      %s49 = sadd.s32 %s48, 1
      %p52 = scmp.eq.s32.totalorder %s14, 1
      %p53 = scmp.ne.s32.totalorder %s48, %s50
      %p54 = scmp.eq.s32.totalorder %s14, 0
      %p55 = por %p53, %p54
      %p56 = scmp.ne.s32.totalorder %s48, %s50
      %p57 = scmp.eq.s32.totalorder %s19, 1
      %p58 = por %p56, %p57
      %p59 = scmp.ne.s32.totalorder %s50, %s51
      %p60 = scmp.eq.s32.totalorder %s19, 0
      %p61 = por %p59, %p60
      %p62 = scmp.ne.s32.totalorder %s50, %s51
      %p63 = scmp.eq.s32.totalorder %s20, 1
      %p64 = por %p62, %p63
      %p66 = scmp.ne.s32.totalorder %s51, %s65
      %p67 = scmp.eq.s32.totalorder %s20, 0
      %p68 = por %p66, %p67
      %s70 = sadd.s32 %s69, 1
      %p73 = scmp.eq.s32.totalorder %s14, 1
      %p74 = scmp.ne.s32.totalorder %s69, %s71
      %p75 = scmp.eq.s32.totalorder %s14, 0
      %p76 = por %p74, %p75
      %p77 = scmp.ne.s32.totalorder %s69, %s71
      %p78 = scmp.eq.s32.totalorder %s19, 1
      %p79 = por %p77, %p78
      %p80 = scmp.ne.s32.totalorder %s71, %s72
      %p81 = scmp.eq.s32.totalorder %s19, 0
      %p82 = por %p80, %p81
      %p83 = scmp.ne.s32.totalorder %s71, %s72
      %p84 = scmp.eq.s32.totalorder %s20, 1
      %p85 = por %p83, %p84
      %p87 = scmp.ne.s32.totalorder %s72, %s86
      %p88 = scmp.eq.s32.totalorder %s20, 0
      %p89 = por %p87, %p88
      %s91 = sadd.s32 %s90, 1
      %p94 = scmp.eq.s32.totalorder %s14, 1
      %p95 = scmp.ne.s32.totalorder %s90, %s92
      %p96 = scmp.eq.s32.totalorder %s14, 0
      %p97 = por %p95, %p96
      %p98 = scmp.ne.s32.totalorder %s90, %s92
      %p99 = scmp.eq.s32.totalorder %s19, 1
      %p100 = por %p98, %p99
      %p101 = scmp.ne.s32.totalorder %s92, %s93
      %p102 = scmp.eq.s32.totalorder %s19, 0
      %p103 = por %p101, %p102
      %p104 = scmp.ne.s32.totalorder %s92, %s93
      %p105 = scmp.eq.s32.totalorder %s20, 1
      %p106 = por %p104, %p105
      %p108 = scmp.ne.s32.totalorder %s93, %s107
      %p109 = scmp.eq.s32.totalorder %s20, 0
      %p110 = por %p108, %p109
      %s112 = sadd.s32 %s111, 1
      %p115 = scmp.eq.s32.totalorder %s14, 1
      %p116 = scmp.ne.s32.totalorder %s111, %s113
      %p117 = scmp.eq.s32.totalorder %s14, 0
      %p118 = por %p116, %p117
      %p119 = scmp.ne.s32.totalorder %s111, %s113
      %p120 = scmp.eq.s32.totalorder %s19, 1
      %p121 = por %p119, %p120
      %p122 = scmp.ne.s32.totalorder %s113, %s114
      %p123 = scmp.eq.s32.totalorder %s19, 0
      %p124 = por %p122, %p123
      %p125 = scmp.ne.s32.totalorder %s113, %s114
      %p126 = scmp.eq.s32.totalorder %s20, 1
      %p127 = por %p125, %p126
      %p129 = scmp.ne.s32.totalorder %s114, %s128
      %p130 = scmp.eq.s32.totalorder %s20, 0
      %p131 = por %p129, %p130
      %s132 = ssub.s32 %s14, %s21
      %p133 = scmp.eq.s32.totalorder %s132, 0
      %s135 = sadd.s32 %s134, 1
      %s136 = scalar_select %p133, %s134, %s135
      %p139 = pneg %p133
      %p140 = scmp.eq.s32.totalorder %s14, 1
      %p141 = por %p139, %p140
      %p142 = scmp.ne.s32.totalorder %s134, %s137
      %p143 = scmp.eq.s32.totalorder %s14, 0
      %p144 = por %p142, %p143
      %p145 = scmp.ne.s32.totalorder %s134, %s137
      %p146 = scmp.eq.s32.totalorder %s19, 1
      %p147 = por %p145, %p146
      %p148 = scmp.ne.s32.totalorder %s137, %s138
      %p149 = scmp.eq.s32.totalorder %s19, 0
      %p150 = por %p148, %p149
      %p151 = scmp.ne.s32.totalorder %s137, %s138
      %p152 = scmp.eq.s32.totalorder %s20, 1
      %p153 = por %p151, %p152
      %p155 = scmp.ne.s32.totalorder %s138, %s154
      %p156 = scmp.eq.s32.totalorder %s20, 0
      %p157 = por %p155, %p156
      %p158 = scmp.le.s32.totalorder 1, %s14
      %p159 = scmp.lt.s32.totalorder %s14, 3
      %p160 = pnand %p158, %p159
      %p161 = pneg %p160
      // Predicated region
      $region9: #{tpu_custom_call.1} parent=5 // pred_check
        _
      $region10: #{tpu_custom_call.1} parent=5 // pred_check_branch
        %163 = sbr.rel (%p160) target = $region12
      $region11: #{tpu_custom_call.1} parent=5 // pred_region
        %s164 = ssub.s32 %s14, 1
        // Predicated region
        $region13: #{tpu_custom_call.1} parent=11 // pred_check
          %p165 = pneg %p61
        $region14: #{tpu_custom_call.1} parent=11 // pred_check_branch
          %167 = sbr.rel (%p165) target = $region16
        $region15: #{tpu_custom_call.1} parent=11 // pred_region
          _
        $region16: #{tpu_custom_call.1} parent=11 // pred_fallthru
          _
        // Predicated region
        $region17: #{tpu_custom_call.1} parent=11 // pred_check
          %p168 = pneg %p82
        $region18: #{tpu_custom_call.1} parent=11 // pred_check_branch
          %170 = sbr.rel (%p168) target = $region20
        $region19: #{tpu_custom_call.1} parent=11 // pred_region
          _
        $region20: #{tpu_custom_call.1} parent=11 // pred_fallthru
          _
        // Predicated region
        $region21: #{tpu_custom_call.1} parent=11 // pred_check
          %p171 = pneg %p103
        $region22: #{tpu_custom_call.1} parent=11 // pred_check_branch
          %173 = sbr.rel (%p171) target = $region24
        $region23: #{tpu_custom_call.1} parent=11 // pred_region
          _
        $region24: #{tpu_custom_call.1} parent=11 // pred_fallthru
          _
        // Predicated region
        $region25: #{tpu_custom_call.1} parent=11 // pred_check
          %p174 = pneg %p124
        $region26: #{tpu_custom_call.1} parent=11 // pred_check_branch
          %176 = sbr.rel (%p174) target = $region28
        $region27: #{tpu_custom_call.1} parent=11 // pred_region
          _
        $region28: #{tpu_custom_call.1} parent=11 // pred_fallthru
          _
      $region12: #{tpu_custom_call.1} parent=5 // pred_fallthru
        _
      %p177 = scmp.lt.s32.totalorder %s14, 2
      // Predicated region
      $region29: #{tpu_custom_call.1} parent=5 // pred_check
        %p178 = pneg %p177
      $region30: #{tpu_custom_call.1} parent=5 // pred_check_branch
        %180 = sbr.rel (%p178) target = $region32
      $region31: #{tpu_custom_call.1} parent=5 // pred_region
        // Predicated region
        $region33: #{tpu_custom_call.1} parent=31 // pred_check
          %p181 = pneg %p34
        $region34: #{tpu_custom_call.1} parent=31 // pred_check_branch
          %183 = sbr.rel (%p181) target = $region36
        $region35: #{tpu_custom_call.1} parent=31 // pred_region
          %s184 = smul.u32 16, %s14
          %p185 = scmp.lt.s32.totalorder %s184, 31
          %s186 = scalar_select %p185, %s184, 31
          %s187 = smul.addr %s186, 8
          %s188 = scalar_lea.vmem %s0, %s187
          %s189 = smul.u32 16, %s14
        $region36: #{tpu_custom_call.1} parent=31 // pred_fallthru
          _
      $region32: #{tpu_custom_call.1} parent=5 // pred_fallthru
        _
      %p190 = scmp.le.s32.totalorder 1, %s14
      %p191 = scmp.lt.s32.totalorder %s14, 3
      %p192 = pnand %p190, %p191
      %p193 = pneg %p192
      // Predicated region
      $region37: #{tpu_custom_call.1} parent=5 // pred_check
        _
      $region38: #{tpu_custom_call.1} parent=5 // pred_check_branch
        %195 = sbr.rel (%p192) target = $region40
      $region39: #{tpu_custom_call.1} parent=5 // pred_region
        %s196 = ssub.s32 %s14, 1
        %s197 = smul.u32 16, %s19
        %p198 = scmp.lt.s32.totalorder %s197, 31
        %s199 = scalar_select %p198, %s197, 31
        %s200 = smul.addr %s199, 8
        %s201 = scalar_lea.vmem %s0, %s200
        %p202 = pneg %p40
        %p203 = pneg %p37
        %p204 = pneg %p61
        %p205 = pneg %p58
        %p206 = pneg %p82
        %p207 = pneg %p79
        %p208 = pneg %p103
        %p209 = pneg %p100
        %p210 = pneg %p124
        %p211 = pneg %p121
        %p212 = pneg %p150
        %p213 = pneg %p147
        %s214 = sand.u32 %s137, 1
        %s215 = scalar_lea.sflag [#allocation3], %s214
        %s216 = sand.u32 %s137, 1
        %s217 = smul.addr %s216, 128
        %s218 = scalar_lea.vmem [#allocation2], %s217
        %s219 = smul.u32 16, %s19
        %p220 = scmp.lt.s32.totalorder %s219, 31
        %s221 = scalar_select %p220, %s219, 31
        %s222 = smul.addr %s221, 8
        %s223 = scalar_lea.vmem %s0, %s222
        %s224 = smul.u32 16, %s19
        %s225 = smul.u32 16, %s19
        %v227 = vld [vmem:[%s223] sm:$0xff]
        %v228 = vld [vmem:[%s223 + $0x8] sm:$0xff]
        %v229 = vld [vmem:[%s223 + $0x10] sm:$0xff]
        %v230 = vld [vmem:[%s223 + $0x18] sm:$0xff]
        %v231 = vld [vmem:[%s223 + $0x20] sm:$0xff]
        %v232 = vld [vmem:[%s223 + $0x28] sm:$0xff]
        %v233 = vld [vmem:[%s223 + $0x30] sm:$0xff]
        %v234 = vld [vmem:[%s223 + $0x38] sm:$0xff]
        %v235 = vld [vmem:[%s223 + $0x40] sm:$0xff]
        %v236 = vld [vmem:[%s223 + $0x48] sm:$0xff]
        %v237 = vld [vmem:[%s223 + $0x50] sm:$0xff]
        %v238 = vld [vmem:[%s223 + $0x58] sm:$0xff]
        %v239 = vld [vmem:[%s223 + $0x60] sm:$0xff]
        %v240 = vld [vmem:[%s223 + $0x68] sm:$0xff]
        %v241 = vld [vmem:[%s223 + $0x70] sm:$0xff]
        %v242 = vld [vmem:[%s223 + $0x78] sm:$0xff]
        %v243 = vpack.c.bf16 %v228, %v227
        %v244 = vpack.c.bf16 %v230, %v229
        %v245 = vpack.c.bf16 %v232, %v231
        %v246 = vpack.c.bf16 %v234, %v233
        %v247 = vpack.c.bf16 %v236, %v235
        %v248 = vpack.c.bf16 %v238, %v237
        %v249 = vpack.c.bf16 %v240, %v239
        %v250 = vpack.c.bf16 %v242, %v241
        %v251 = vld [vmem:[%s1] sm:$0x3]
        %v252 = vld [vmem:[%s4] sm:$0x1]
        %v253 = vunpack.c.l.bf16 %v252
        %v254 = vlaneseq
        %v255 = vshrl.u32 %v254, 7
        %v256 = vsub.s32 0, %v255
        %v257 = vrot.slane %v253, %v256
        %vm258 = vcmask 31744
        %v260 = vsel %vm258, %v243, 0
        %v263 = vsel %vm258, %v244, 0
        %v266 = vsel %vm258, %v245, 0
        %v269 = vsel %vm258, %v246, 0
        %v272 = vsel %vm258, %v247, 0
        %v275 = vsel %vm258, %v248, 0
        %v278 = vsel %vm258, %v249, 0
        %v281 = vsel %vm258, %v250, 0
        %vm283 = vcmask 1041408
        %v285 = vsel %vm283, %v251, 0
        %287 = vmatprep.subr.bf16.mxu0 0
        %288 = vmatpush1.bf16.msra.mxu0 0
        %289 = vmatprep.subr.bf16.mxu0 0
        %290 = vmatpush1.bf16.msra.mxu0 0
        %291 = vmatprep.subr.bf16.mxu0 0
        %292 = vmatpush1.bf16.msra.mxu0 0
        %293 = vmatprep.subr.bf16.mxu0 0
        %294 = vmatpush1.bf16.msra.mxu0 0
        %295 = vmatprep.subr.bf16.mxu0 0
        %296 = vmatpush1.bf16.msra.mxu0 0
        %297 = vmatprep.subr.bf16.mxu0 0
        %298 = vmatpush1.bf16.msra.mxu0 0
        %299 = vmatprep.subr.bf16.mxu0 0
        %300 = vmatpush1.bf16.msra.mxu0 0
        %301 = vmatprep.subr.bf16.mxu0 0
        %302 = vmatpush1.bf16.msra.mxu0 %v285
        %303 = vmatprep.subr.bf16.mxu0 0
        %304 = vmatpush2.bf16.msra.mxu0 0
        %305 = vmatprep.subr.bf16.mxu0 0
        %306 = vmatpush2.bf16.msra.mxu0 0
        %307 = vmatprep.subr.bf16.mxu0 0
        %308 = vmatpush2.bf16.msra.mxu0 0
        %309 = vmatprep.subr.bf16.mxu0 0
        %310 = vmatpush2.bf16.msra.mxu0 0
        %311 = vmatprep.subr.bf16.mxu0 0
        %312 = vmatpush2.bf16.msra.mxu0 0
        %313 = vmatprep.subr.bf16.mxu0 0
        %314 = vmatpush2.bf16.msra.mxu0 0
        %315 = vmatprep.subr.bf16.mxu0 0
        %316 = vmatpush2.bf16.msra.mxu0 0
        %317 = vmatprep.subr.bf16.mxu0 0
        %318 = vmatpush2.bf16.msra.mxu0 0
        %319 = vmatprep.mubr.bf16.mxu0 0
        %320 = vmatmul.mubr.bf16.gmra.mxu0 %v260
        %v321 = vpop.f32.mrf.mxu0
        %v322 = vadd.f32 %v257, %v321
        %v323 = vpop.f32.mrf.mxu0
        %v324 = vpop.f32.mrf.mxu0
        %v325 = vadd.f32 %v257, %v324
        %v326 = vpop.f32.mrf.mxu0
        %327 = vmatprep.mubr.bf16.mxu0 0
        %328 = vmatmul.mubr.bf16.gmra.mxu0 %v263
        %v329 = vpop.f32.mrf.mxu0
        %v330 = vadd.f32 %v257, %v329
        %v331 = vpop.f32.mrf.mxu0
        %v332 = vpop.f32.mrf.mxu0
        %v333 = vadd.f32 %v257, %v332
        %v334 = vpop.f32.mrf.mxu0
        %335 = vmatprep.mubr.bf16.mxu0 0
        %336 = vmatmul.mubr.bf16.gmra.mxu0 %v266
        %v337 = vpop.f32.mrf.mxu0
        %v338 = vadd.f32 %v257, %v337
        %v339 = vpop.f32.mrf.mxu0
        %v340 = vpop.f32.mrf.mxu0
        %v341 = vadd.f32 %v257, %v340
        %v342 = vpop.f32.mrf.mxu0
        %343 = vmatprep.mubr.bf16.mxu0 0
        %344 = vmatmul.mubr.bf16.gmra.mxu0 %v269
        %v345 = vpop.f32.mrf.mxu0
        %v346 = vadd.f32 %v257, %v345
        %v347 = vpop.f32.mrf.mxu0
        %v348 = vpop.f32.mrf.mxu0
        %v349 = vadd.f32 %v257, %v348
        %v350 = vpop.f32.mrf.mxu0
        %351 = vmatprep.mubr.bf16.mxu0 0
        %352 = vmatmul.mubr.bf16.gmra.mxu0 %v272
        %v353 = vpop.f32.mrf.mxu0
        %v354 = vadd.f32 %v257, %v353
        %v355 = vpop.f32.mrf.mxu0
        %v356 = vpop.f32.mrf.mxu0
        %v357 = vadd.f32 %v257, %v356
        %v358 = vpop.f32.mrf.mxu0
        %359 = vmatprep.mubr.bf16.mxu0 0
        %360 = vmatmul.mubr.bf16.gmra.mxu0 %v275
        %v361 = vpop.f32.mrf.mxu0
        %v362 = vadd.f32 %v257, %v361
        %v363 = vpop.f32.mrf.mxu0
        %v364 = vpop.f32.mrf.mxu0
        %v365 = vadd.f32 %v257, %v364
        %v366 = vpop.f32.mrf.mxu0
        %367 = vmatprep.mubr.bf16.mxu0 0
        %368 = vmatmul.mubr.bf16.gmra.mxu0 %v278
        %v369 = vpop.f32.mrf.mxu0
        %v370 = vadd.f32 %v257, %v369
        %v371 = vpop.f32.mrf.mxu0
        %v372 = vpop.f32.mrf.mxu0
        %v373 = vadd.f32 %v257, %v372
        %v374 = vpop.f32.mrf.mxu0
        %375 = vmatprep.mubr.bf16.mxu0 0
        %376 = vmatmul.mubr.bf16.gmra.mxu0 %v281
        %v377 = vpop.f32.mrf.mxu0
        %v378 = vadd.f32 %v257, %v377
        %v379 = vpop.f32.mrf.mxu0
        %v380 = vpop.f32.mrf.mxu0
        %v381 = vadd.f32 %v257, %v380
        %v382 = vpop.f32.mrf.mxu0
        %383 = vdwg.mxu0
        %v384 = vmax.f32 %v322, 0.0
        %v385 = vmax.f32 %v325, 0.0
        %v386 = vmax.f32 %v330, 0.0
        %v387 = vmax.f32 %v333, 0.0
        %v388 = vmax.f32 %v338, 0.0
        %v389 = vmax.f32 %v341, 0.0
        %v390 = vmax.f32 %v346, 0.0
        %v391 = vmax.f32 %v349, 0.0
        %v392 = vmax.f32 %v354, 0.0
        %v393 = vmax.f32 %v357, 0.0
        %v394 = vmax.f32 %v362, 0.0
        %v395 = vmax.f32 %v365, 0.0
        %v396 = vmax.f32 %v370, 0.0
        %v397 = vmax.f32 %v373, 0.0
        %v398 = vmax.f32 %v378, 0.0
        %v399 = vmax.f32 %v381, 0.0
        %v400 = vpack.c.bf16 %v385, %v384
        %v401 = vpack.c.bf16 %v387, %v386
        %v402 = vpack.c.bf16 %v389, %v388
        %v403 = vpack.c.bf16 %v391, %v390
        %v404 = vpack.c.bf16 %v393, %v392
        %v405 = vpack.c.bf16 %v395, %v394
        %v406 = vpack.c.bf16 %v397, %v396
        %v407 = vpack.c.bf16 %v399, %v398
        %v408 = vld [vmem:[%s2] sm:$0xf]
        %v409 = vld [vmem:[%s2 + $0x4] sm:$0xf]
        %v410 = vld [vmem:[%s2 + $0x8] sm:$0xf]
        %v411 = vld [vmem:[%s2 + $0xc] sm:$0xf]
        %v412 = vld [vmem:[%s2 + $0x10] sm:$0xf]
        %v413 = vld [vmem:[%s2 + $0x14] sm:$0xf]
        %v414 = vld [vmem:[%s2 + $0x18] sm:$0xf]
        %v415 = vld [vmem:[%s2 + $0x1c] sm:$0xf]
        %v416 = vld [vmem:[%s2 + $0x20] sm:$0xf]
        %v417 = vld [vmem:[%s2 + $0x24] sm:$0xf]
        %v418 = vld [vmem:[%s2 + $0x28] sm:$0xf]
        %v419 = vld [vmem:[%s2 + $0x2c] sm:$0xf]
        %v420 = vld [vmem:[%s2 + $0x30] sm:$0xf]
        %v421 = vld [vmem:[%s2 + $0x34] sm:$0xf]
        %v422 = vld [vmem:[%s2 + $0x38] sm:$0xf]
        %v423 = vld [vmem:[%s2 + $0x3c] sm:$0xf]
        %v424 = vlaneseq
        %v425 = vshrl.u32 %v424, 7
        %v426 = vsub.s32 1, %v425
        %v427 = vrot.slane %v253, %v426
        %v444 = vunpack.c.l.b16 %v408
        %v445 = vunpack.c.l.b16 %v409
        %v446 = vunpack.c.l.b16 %v410
        %v447 = vunpack.c.l.b16 %v411
        %v448 = vunpack.c.l.b16 %v412
        %v449 = vunpack.c.l.b16 %v413
        %v450 = vunpack.c.l.b16 %v414
        %v451 = vunpack.c.l.b16 %v415
        %v452 = vunpack.c.l.b16 %v416
        %v453 = vunpack.c.l.b16 %v417
        %v454 = vunpack.c.l.b16 %v418
        %v455 = vunpack.c.l.b16 %v419
        %v456 = vunpack.c.l.b16 %v420
        %v457 = vunpack.c.l.b16 %v421
        %v458 = vunpack.c.l.b16 %v422
        %v459 = vunpack.c.l.b16 %v423
        %v460 = vpack.c.b16 %v445, %v444
        %v461 = vpack.c.b16 %v447, %v446
        %v462 = vpack.c.b16 %v449, %v448
        %v463 = vpack.c.b16 %v451, %v450
        %v464 = vpack.c.b16 %v453, %v452
        %v465 = vpack.c.b16 %v455, %v454
        %v466 = vpack.c.b16 %v457, %v456
        %v467 = vpack.c.b16 %v459, %v458
        %476 = vmatprep.subr.bf16.mxu0 0
        %477 = vmatpush1.bf16.msra.mxu0 %v467
        %478 = vmatprep.subr.bf16.mxu0 0
        %479 = vmatpush1.bf16.msra.mxu0 %v466
        %480 = vmatprep.subr.bf16.mxu0 0
        %481 = vmatpush1.bf16.msra.mxu0 %v465
        %482 = vmatprep.subr.bf16.mxu0 0
        %483 = vmatpush1.bf16.msra.mxu0 %v464
        %484 = vmatprep.subr.bf16.mxu0 0
        %485 = vmatpush1.bf16.msra.mxu0 %v463
        %486 = vmatprep.subr.bf16.mxu0 0
        %487 = vmatpush1.bf16.msra.mxu0 %v462
        %488 = vmatprep.subr.bf16.mxu0 0
        %489 = vmatpush1.bf16.msra.mxu0 %v461
        %490 = vmatprep.subr.bf16.mxu0 0
        %491 = vmatpush1.bf16.msra.mxu0 %v460
        %492 = vmatprep.subr.bf16.mxu0 0
        %493 = vmatpush2.bf16.msra.mxu0 0
        %494 = vmatprep.subr.bf16.mxu0 0
        %495 = vmatpush2.bf16.msra.mxu0 0
        %496 = vmatprep.subr.bf16.mxu0 0
        %497 = vmatpush2.bf16.msra.mxu0 0
        %498 = vmatprep.subr.bf16.mxu0 0
        %499 = vmatpush2.bf16.msra.mxu0 0
        %500 = vmatprep.subr.bf16.mxu0 0
        %501 = vmatpush2.bf16.msra.mxu0 0
        %502 = vmatprep.subr.bf16.mxu0 0
        %503 = vmatpush2.bf16.msra.mxu0 0
        %504 = vmatprep.subr.bf16.mxu0 0
        %505 = vmatpush2.bf16.msra.mxu0 0
        %506 = vmatprep.subr.bf16.mxu0 0
        %507 = vmatpush2.bf16.msra.mxu0 0
        %508 = vmatprep.mubr.bf16.mxu0 0
        %509 = vmatmul.mubr.bf16.gmra.mxu0 %v400
        %v510 = vpop.f32.mrf.mxu0
        %v511 = vadd.f32 %v427, %v510
        %v512 = vpop.f32.mrf.mxu0
        %v513 = vpop.f32.mrf.mxu0
        %v514 = vadd.f32 %v427, %v513
        %v515 = vpop.f32.mrf.mxu0
        %516 = vmatprep.mubr.bf16.mxu0 0
        %517 = vmatmul.mubr.bf16.gmra.mxu0 %v401
        %v518 = vpop.f32.mrf.mxu0
        %v519 = vadd.f32 %v427, %v518
        %v520 = vpop.f32.mrf.mxu0
        %v521 = vpop.f32.mrf.mxu0
        %v522 = vadd.f32 %v427, %v521
        %v523 = vpop.f32.mrf.mxu0
        %524 = vmatprep.mubr.bf16.mxu0 0
        %525 = vmatmul.mubr.bf16.gmra.mxu0 %v402
        %v526 = vpop.f32.mrf.mxu0
        %v527 = vadd.f32 %v427, %v526
        %v528 = vpop.f32.mrf.mxu0
        %v529 = vpop.f32.mrf.mxu0
        %v530 = vadd.f32 %v427, %v529
        %v531 = vpop.f32.mrf.mxu0
        %532 = vmatprep.mubr.bf16.mxu0 0
        %533 = vmatmul.mubr.bf16.gmra.mxu0 %v403
        %v534 = vpop.f32.mrf.mxu0
        %v535 = vadd.f32 %v427, %v534
        %v536 = vpop.f32.mrf.mxu0
        %v537 = vpop.f32.mrf.mxu0
        %v538 = vadd.f32 %v427, %v537
        %v539 = vpop.f32.mrf.mxu0
        %540 = vmatprep.mubr.bf16.mxu0 0
        %541 = vmatmul.mubr.bf16.gmra.mxu0 %v404
        %v542 = vpop.f32.mrf.mxu0
        %v543 = vadd.f32 %v427, %v542
        %v544 = vpop.f32.mrf.mxu0
        %v545 = vpop.f32.mrf.mxu0
        %v546 = vadd.f32 %v427, %v545
        %v547 = vpop.f32.mrf.mxu0
        %548 = vmatprep.mubr.bf16.mxu0 0
        %549 = vmatmul.mubr.bf16.gmra.mxu0 %v405
        %v550 = vpop.f32.mrf.mxu0
        %v551 = vadd.f32 %v427, %v550
        %v552 = vpop.f32.mrf.mxu0
        %v553 = vpop.f32.mrf.mxu0
        %v554 = vadd.f32 %v427, %v553
        %v555 = vpop.f32.mrf.mxu0
        %556 = vmatprep.mubr.bf16.mxu0 0
        %557 = vmatmul.mubr.bf16.gmra.mxu0 %v406
        %v558 = vpop.f32.mrf.mxu0
        %v559 = vadd.f32 %v427, %v558
        %v560 = vpop.f32.mrf.mxu0
        %v561 = vpop.f32.mrf.mxu0
        %v562 = vadd.f32 %v427, %v561
        %v563 = vpop.f32.mrf.mxu0
        %564 = vmatprep.mubr.bf16.mxu0 0
        %565 = vmatmul.mubr.bf16.gmra.mxu0 %v407
        %v566 = vpop.f32.mrf.mxu0
        %v567 = vadd.f32 %v427, %v566
        %v568 = vpop.f32.mrf.mxu0
        %v569 = vpop.f32.mrf.mxu0
        %v570 = vadd.f32 %v427, %v569
        %v571 = vpop.f32.mrf.mxu0
        %572 = vdwg.mxu0
        %v573 = vmax.f32 %v511, 0.0
        %v574 = vmax.f32 %v514, 0.0
        %v575 = vmax.f32 %v519, 0.0
        %v576 = vmax.f32 %v522, 0.0
        %v577 = vmax.f32 %v527, 0.0
        %v578 = vmax.f32 %v530, 0.0
        %v579 = vmax.f32 %v535, 0.0
        %v580 = vmax.f32 %v538, 0.0
        %v581 = vmax.f32 %v543, 0.0
        %v582 = vmax.f32 %v546, 0.0
        %v583 = vmax.f32 %v551, 0.0
        %v584 = vmax.f32 %v554, 0.0
        %v585 = vmax.f32 %v559, 0.0
        %v586 = vmax.f32 %v562, 0.0
        %v587 = vmax.f32 %v567, 0.0
        %v588 = vmax.f32 %v570, 0.0
        %v589 = vpack.c.bf16 %v574, %v573
        %v590 = vpack.c.bf16 %v576, %v575
        %v591 = vpack.c.bf16 %v578, %v577
        %v592 = vpack.c.bf16 %v580, %v579
        %v593 = vpack.c.bf16 %v582, %v581
        %v594 = vpack.c.bf16 %v584, %v583
        %v595 = vpack.c.bf16 %v586, %v585
        %v596 = vpack.c.bf16 %v588, %v587
        %v597 = vld [vmem:[%s3] sm:$0xf]
        %v598 = vld [vmem:[%s3 + $0x4] sm:$0xf]
        %v599 = vld [vmem:[%s3 + $0x8] sm:$0xf]
        %v600 = vld [vmem:[%s3 + $0xc] sm:$0xf]
        %v601 = vld [vmem:[%s3 + $0x10] sm:$0xf]
        %v602 = vld [vmem:[%s3 + $0x14] sm:$0xf]
        %v603 = vld [vmem:[%s3 + $0x18] sm:$0xf]
        %v604 = vld [vmem:[%s3 + $0x1c] sm:$0xf]
        %v605 = vld [vmem:[%s3 + $0x20] sm:$0xf]
        %v606 = vld [vmem:[%s3 + $0x24] sm:$0xf]
        %v607 = vld [vmem:[%s3 + $0x28] sm:$0xf]
        %v608 = vld [vmem:[%s3 + $0x2c] sm:$0xf]
        %v609 = vld [vmem:[%s3 + $0x30] sm:$0xf]
        %v610 = vld [vmem:[%s3 + $0x34] sm:$0xf]
        %v611 = vld [vmem:[%s3 + $0x38] sm:$0xf]
        %v612 = vld [vmem:[%s3 + $0x3c] sm:$0xf]
        %v613 = vld [vmem:[%s4] sm:$0x2]
        %v614 = vunpack.c.l.bf16 %v613
        %v615 = vlaneseq
        %v616 = vshrl.u32 %v615, 7
        %v617 = vsub.s32 2, %v616
        %v618 = vrot.slane %v614, %v617
        %v635 = vunpack.c.l.b16 %v597
        %v636 = vunpack.c.l.b16 %v598
        %v637 = vunpack.c.l.b16 %v599
        %v638 = vunpack.c.l.b16 %v600
        %v639 = vunpack.c.l.b16 %v601
        %v640 = vunpack.c.l.b16 %v602
        %v641 = vunpack.c.l.b16 %v603
        %v642 = vunpack.c.l.b16 %v604
        %v643 = vunpack.c.l.b16 %v605
        %v644 = vunpack.c.l.b16 %v606
        %v645 = vunpack.c.l.b16 %v607
        %v646 = vunpack.c.l.b16 %v608
        %v647 = vunpack.c.l.b16 %v609
        %v648 = vunpack.c.l.b16 %v610
        %v649 = vunpack.c.l.b16 %v611
        %v650 = vunpack.c.l.b16 %v612
        %v651 = vpack.c.b16 %v636, %v635
        %v652 = vpack.c.b16 %v638, %v637
        %v653 = vpack.c.b16 %v640, %v639
        %v654 = vpack.c.b16 %v642, %v641
        %v655 = vpack.c.b16 %v644, %v643
        %v656 = vpack.c.b16 %v646, %v645
        %v657 = vpack.c.b16 %v648, %v647
        %v658 = vpack.c.b16 %v650, %v649
        %667 = vmatprep.subr.bf16.mxu0 0
        %668 = vmatpush1.bf16.msra.mxu0 %v658
        %669 = vmatprep.subr.bf16.mxu0 0
        %670 = vmatpush1.bf16.msra.mxu0 %v657
        %671 = vmatprep.subr.bf16.mxu0 0
        %672 = vmatpush1.bf16.msra.mxu0 %v656
        %673 = vmatprep.subr.bf16.mxu0 0
        %674 = vmatpush1.bf16.msra.mxu0 %v655
        %675 = vmatprep.subr.bf16.mxu0 0
        %676 = vmatpush1.bf16.msra.mxu0 %v654
        %677 = vmatprep.subr.bf16.mxu0 0
        %678 = vmatpush1.bf16.msra.mxu0 %v653
        %679 = vmatprep.subr.bf16.mxu0 0
        %680 = vmatpush1.bf16.msra.mxu0 %v652
        %681 = vmatprep.subr.bf16.mxu0 0
        %682 = vmatpush1.bf16.msra.mxu0 %v651
        %683 = vmatprep.subr.bf16.mxu0 0
        %684 = vmatpush2.bf16.msra.mxu0 0
        %685 = vmatprep.subr.bf16.mxu0 0
        %686 = vmatpush2.bf16.msra.mxu0 0
        %687 = vmatprep.subr.bf16.mxu0 0
        %688 = vmatpush2.bf16.msra.mxu0 0
        %689 = vmatprep.subr.bf16.mxu0 0
        %690 = vmatpush2.bf16.msra.mxu0 0
        %691 = vmatprep.subr.bf16.mxu0 0
        %692 = vmatpush2.bf16.msra.mxu0 0
        %693 = vmatprep.subr.bf16.mxu0 0
        %694 = vmatpush2.bf16.msra.mxu0 0
        %695 = vmatprep.subr.bf16.mxu0 0
        %696 = vmatpush2.bf16.msra.mxu0 0
        %697 = vmatprep.subr.bf16.mxu0 0
        %698 = vmatpush2.bf16.msra.mxu0 0
        %699 = vmatprep.mubr.bf16.mxu0 0
        %700 = vmatmul.mubr.bf16.gmra.mxu0 %v589
        %v701 = vpop.f32.mrf.mxu0
        %v702 = vadd.f32 %v618, %v701
        %v703 = vpop.f32.mrf.mxu0
        %v704 = vpop.f32.mrf.mxu0
        %v705 = vadd.f32 %v618, %v704
        %v706 = vpop.f32.mrf.mxu0
        %707 = vmatprep.mubr.bf16.mxu0 0
        %708 = vmatmul.mubr.bf16.gmra.mxu0 %v590
        %v709 = vpop.f32.mrf.mxu0
        %v710 = vadd.f32 %v618, %v709
        %v711 = vpop.f32.mrf.mxu0
        %v712 = vpop.f32.mrf.mxu0
        %v713 = vadd.f32 %v618, %v712
        %v714 = vpop.f32.mrf.mxu0
        %715 = vmatprep.mubr.bf16.mxu0 0
        %716 = vmatmul.mubr.bf16.gmra.mxu0 %v591
        %v717 = vpop.f32.mrf.mxu0
        %v718 = vadd.f32 %v618, %v717
        %v719 = vpop.f32.mrf.mxu0
        %v720 = vpop.f32.mrf.mxu0
        %v721 = vadd.f32 %v618, %v720
        %v722 = vpop.f32.mrf.mxu0
        %723 = vmatprep.mubr.bf16.mxu0 0
        %724 = vmatmul.mubr.bf16.gmra.mxu0 %v592
        %v725 = vpop.f32.mrf.mxu0
        %v726 = vadd.f32 %v618, %v725
        %v727 = vpop.f32.mrf.mxu0
        %v728 = vpop.f32.mrf.mxu0
        %v729 = vadd.f32 %v618, %v728
        %v730 = vpop.f32.mrf.mxu0
        %731 = vmatprep.mubr.bf16.mxu0 0
        %732 = vmatmul.mubr.bf16.gmra.mxu0 %v593
        %v733 = vpop.f32.mrf.mxu0
        %v734 = vadd.f32 %v618, %v733
        %v735 = vpop.f32.mrf.mxu0
        %v736 = vpop.f32.mrf.mxu0
        %v737 = vadd.f32 %v618, %v736
        %v738 = vpop.f32.mrf.mxu0
        %739 = vmatprep.mubr.bf16.mxu0 0
        %740 = vmatmul.mubr.bf16.gmra.mxu0 %v594
        %v741 = vpop.f32.mrf.mxu0
        %v742 = vadd.f32 %v618, %v741
        %v743 = vpop.f32.mrf.mxu0
        %v744 = vpop.f32.mrf.mxu0
        %v745 = vadd.f32 %v618, %v744
        %v746 = vpop.f32.mrf.mxu0
        %747 = vmatprep.mubr.bf16.mxu0 0
        %748 = vmatmul.mubr.bf16.gmra.mxu0 %v595
        %v749 = vpop.f32.mrf.mxu0
        %v750 = vadd.f32 %v618, %v749
        %v751 = vpop.f32.mrf.mxu0
        %v752 = vpop.f32.mrf.mxu0
        %v753 = vadd.f32 %v618, %v752
        %v754 = vpop.f32.mrf.mxu0
        %755 = vmatprep.mubr.bf16.mxu0 0
        %756 = vmatmul.mubr.bf16.gmra.mxu0 %v596
        %v757 = vpop.f32.mrf.mxu0
        %v758 = vadd.f32 %v618, %v757
        %v759 = vpop.f32.mrf.mxu0
        %v760 = vpop.f32.mrf.mxu0
        %v761 = vadd.f32 %v618, %v760
        %v762 = vpop.f32.mrf.mxu0
        %763 = vdwg.mxu0
        %764 = vst [vmem:[%s218] sm:$0xff] %v702
        %765 = vst [vmem:[%s218 + $0x8] sm:$0xff] %v705
        %766 = vst [vmem:[%s218 + $0x10] sm:$0xff] %v710
        %767 = vst [vmem:[%s218 + $0x18] sm:$0xff] %v713
        %768 = vst [vmem:[%s218 + $0x20] sm:$0xff] %v718
        %769 = vst [vmem:[%s218 + $0x28] sm:$0xff] %v721
        %770 = vst [vmem:[%s218 + $0x30] sm:$0xff] %v726
        %771 = vst [vmem:[%s218 + $0x38] sm:$0xff] %v729
        %772 = vst [vmem:[%s218 + $0x40] sm:$0xff] %v734
        %773 = vst [vmem:[%s218 + $0x48] sm:$0xff] %v737
        %774 = vst [vmem:[%s218 + $0x50] sm:$0xff] %v742
        %775 = vst [vmem:[%s218 + $0x58] sm:$0xff] %v745
        %776 = vst [vmem:[%s218 + $0x60] sm:$0xff] %v750
        %777 = vst [vmem:[%s218 + $0x68] sm:$0xff] %v753
        %778 = vst [vmem:[%s218 + $0x70] sm:$0xff] %v758
        %779 = vst [vmem:[%s218 + $0x78] sm:$0xff] %v761
        %s780 = sand.u32 %s137, 1
        %s781 = scalar_lea.sflag [#allocation3], %s780
        %s782 = sand.u32 %s137, 1
        %s783 = smul.addr %s782, 128
        %s784 = scalar_lea.vmem [#allocation2], %s783
        // Predicated region
        $region41: #{tpu_custom_call.1} parent=39 // pred_check
          %p785 = pneg %p147
        $region42: #{tpu_custom_call.1} parent=39 // pred_check_branch
          %787 = sbr.rel (%p785) target = $region44
        $region43: #{tpu_custom_call.1} parent=39 // pred_region
          %s788 = smul.u32 16, %s19
          %s790 = ssub.s32 2048, 2048
          %791 = vsyncadd %s781, %s790
          %s792 = smul.addr %s788, 128
          %s793 = scalar_lea.hbm %s5, %s792
          %s794 = sshll.u32 %s784, 4
          %s795 = int_to_ptr.vmem [resolvable:$true] %s794
          %800 = dma.vmem_to_hbm [thread:$0]  %s795, 2048, %s793, %s781, 128, 128, 8
        $region44: #{tpu_custom_call.1} parent=39 // pred_fallthru
          _
      $region40: #{tpu_custom_call.1} parent=5 // pred_fallthru
        _
      %p801 = scmp.le.s32.totalorder 2, %s14
      // Predicated region
      $region45: #{tpu_custom_call.1} parent=5 // pred_check
        %p802 = pneg %p801
      $region46: #{tpu_custom_call.1} parent=5 // pred_check_branch
        %804 = sbr.rel (%p802) target = $region48
      $region47: #{tpu_custom_call.1} parent=5 // pred_region
        %s805 = ssub.s32 %s14, 2
        // Predicated region
        $region49: #{tpu_custom_call.1} parent=47 // pred_check
          %p806 = pneg %p153
        $region50: #{tpu_custom_call.1} parent=47 // pred_check_branch
          %808 = sbr.rel (%p806) target = $region52
        $region51: #{tpu_custom_call.1} parent=47 // pred_region
          %s809 = sand.u32 %s138, 1
          %s810 = scalar_lea.sflag [#allocation3], %s809
          %s811 = sand.u32 %s138, 1
          %s812 = smul.addr %s811, 128
          %s813 = scalar_lea.vmem [#allocation2], %s812
          %814 = dma.done %s810, 2048
        $region52: #{tpu_custom_call.1} parent=47 // pred_fallthru
          _
      $region48: #{tpu_custom_call.1} parent=5 // pred_fallthru
        _
    $region6: #{tpu_custom_call.1} parent=1 // loop_footer
      %s18 = sadd.s32 1, %s14
    $region7: #{tpu_custom_call.1} parent=1 // loop_footer_branch
      %13 = sbr.rel target = $region3
    $region8: #{tpu_custom_call.1} parent=1 // loop_exit
      _
    %815 = vsyncpa [#allocation3], 1
    %s816 = scalar_lea.sflag [#allocation3], 1
    %817 = vsyncpa %s816, 1

// kernel: tpu_custom_call.1
$region0: #{tpu_custom_call.1}
  #allocation0 [shape = 'u32[]', space=smem, size = 0x4, offset = 0x4, fixed_abs, tag = 'smem constant byte address 0x4 - core index']
  #allocation1 [shape = 'u32[144,128]{1,0:T(1,128)}', space=vmem, size = 0x12000, scoped, tag = 'internal scratch']
  %s0 = inlined_call_operand.vmem [shape: f32[256,4], index: 0, kind: input, shape index: {}]
  %s1 = inlined_call_operand.vmem [shape: bf16[4,128], index: 1, kind: input, shape index: {}]
  %s2 = inlined_call_operand.vmem [shape: bf16[128,128], index: 2, kind: input, shape index: {}]
  %s3 = inlined_call_operand.vmem [shape: bf16[128,128], index: 3, kind: input, shape index: {}]
  %s4 = inlined_call_operand.vmem [shape: bf16[3,128], index: 4, kind: input, shape index: {}]
  %s5 = inlined_call_operand.hbm [shape: f32[256,128], index: 5, kind: output, shape index: {}]
  %s6 = sld [smem:[#allocation0]]
  $region53: #{tpu_custom_call.1} parent=0
    _
  %s8 = ssub.s32 1, %s6
  %s9 = scalar_select 0, %s8, %s6
  $region1: #{tpu_custom_call.1} parent=0
    #allocation2 [shape = 'u8[131072]{0}', space=vmem, size = 0x20000, scoped, tag = 'output window, operand 0']
    #allocation3 [shape = 's32[2]{0}', space=sflag, size = 0x8, scoped, tag = 'scoped memory for tpu_custom_call.1']
    %10 = vsyncpa [#allocation3], 0
    %s11 = scalar_lea.sflag [#allocation3], 1
    %12 = vsyncpa %s11, 0
    loop: start=0, step=1, limit=4
    $region2: #{tpu_custom_call.1} parent=1 // loop_pre_header
      _
    $region3: #{tpu_custom_call.1} parent=1 // loop_header
      %s14 = sphi 0, %s18
      %p15 = scmp.ge.s32.totalorder %s14, 4
      %s24 = sphi 0, %s26
      %s27 = sphi 0, %s24
      %s28 = sphi 0, %s27
      %s44 = sphi 0, %s28
      %s48 = sphi 0, %s48
      %s50 = sphi 0, %s48
      %s51 = sphi 0, %s50
      %s65 = sphi 0, %s51
      %s69 = sphi 0, %s69
      %s71 = sphi 0, %s69
      %s72 = sphi 0, %s71
      %s86 = sphi 0, %s72
      %s90 = sphi 0, %s90
      %s92 = sphi 0, %s90
      %s93 = sphi 0, %s92
      %s107 = sphi 0, %s93
      %s111 = sphi 0, %s111
      %s113 = sphi 0, %s111
      %s114 = sphi 0, %s113
      %s128 = sphi 0, %s114
      %s134 = sphi 0, %s136
      %s137 = sphi 0, %s134
      %s138 = sphi 0, %s137
      %s154 = sphi 0, %s138
    $region4: #{tpu_custom_call.1} parent=1 // loop_header_branch
      %17 = sbr.rel (%p15) target = $region8
    $region5: #{tpu_custom_call.1} parent=1 // loop_body
      %s19 = ssub.s32 %s14, 1
      %s20 = ssub.s32 %s14, 2
      %s21 = sadd.s32 %s14, 1
      %s22 = ssub.s32 %s14, %s21
      %p23 = scmp.eq.s32.totalorder %s22, 0
      %s25 = sadd.s32 %s24, 1
      %s26 = scalar_select %p23, %s24, %s25
      %p29 = pneg %p23
      %p30 = scmp.eq.s32.totalorder %s14, 1
      %p31 = por %p29, %p30
      %p32 = scmp.ne.s32.totalorder %s24, %s27
      %p33 = scmp.eq.s32.totalorder %s14, 0
      %p34 = por %p32, %p33
      %p35 = scmp.ne.s32.totalorder %s24, %s27
      %p36 = scmp.eq.s32.totalorder %s19, 1
      %p37 = por %p35, %p36
      %p38 = scmp.ne.s32.totalorder %s27, %s28
      %p39 = scmp.eq.s32.totalorder %s19, 0
      %p40 = por %p38, %p39
      %p41 = scmp.ne.s32.totalorder %s27, %s28
      %p42 = scmp.eq.s32.totalorder %s20, 1
      %p43 = por %p41, %p42
      %p45 = scmp.ne.s32.totalorder %s28, %s44
      %p46 = scmp.eq.s32.totalorder %s20, 0
      %p47 = por %p45, %p46
      %s49 = sadd.s32 %s48, 1
      %p52 = scmp.eq.s32.totalorder %s14, 1
      %p53 = scmp.ne.s32.totalorder %s48, %s50
      %p54 = scmp.eq.s32.totalorder %s14, 0
      %p55 = por %p53, %p54
      %p56 = scmp.ne.s32.totalorder %s48, %s50
      %p57 = scmp.eq.s32.totalorder %s19, 1
      %p58 = por %p56, %p57
      %p59 = scmp.ne.s32.totalorder %s50, %s51
      %p60 = scmp.eq.s32.totalorder %s19, 0
      %p61 = por %p59, %p60
      %p62 = scmp.ne.s32.totalorder %s50, %s51
      %p63 = scmp.eq.s32.totalorder %s20, 1
      %p64 = por %p62, %p63
      %p66 = scmp.ne.s32.totalorder %s51, %s65
      %p67 = scmp.eq.s32.totalorder %s20, 0
      %p68 = por %p66, %p67
      %s70 = sadd.s32 %s69, 1
      %p73 = scmp.eq.s32.totalorder %s14, 1
      %p74 = scmp.ne.s32.totalorder %s69, %s71
      %p75 = scmp.eq.s32.totalorder %s14, 0
      %p76 = por %p74, %p75
      %p77 = scmp.ne.s32.totalorder %s69, %s71
      %p78 = scmp.eq.s32.totalorder %s19, 1
      %p79 = por %p77, %p78
      %p80 = scmp.ne.s32.totalorder %s71, %s72
      %p81 = scmp.eq.s32.totalorder %s19, 0
      %p82 = por %p80, %p81
      %p83 = scmp.ne.s32.totalorder %s71, %s72
      %p84 = scmp.eq.s32.totalorder %s20, 1
      %p85 = por %p83, %p84
      %p87 = scmp.ne.s32.totalorder %s72, %s86
      %p88 = scmp.eq.s32.totalorder %s20, 0
      %p89 = por %p87, %p88
      %s91 = sadd.s32 %s90, 1
      %p94 = scmp.eq.s32.totalorder %s14, 1
      %p95 = scmp.ne.s32.totalorder %s90, %s92
      %p96 = scmp.eq.s32.totalorder %s14, 0
      %p97 = por %p95, %p96
      %p98 = scmp.ne.s32.totalorder %s90, %s92
      %p99 = scmp.eq.s32.totalorder %s19, 1
      %p100 = por %p98, %p99
      %p101 = scmp.ne.s32.totalorder %s92, %s93
      %p102 = scmp.eq.s32.totalorder %s19, 0
      %p103 = por %p101, %p102
      %p104 = scmp.ne.s32.totalorder %s92, %s93
      %p105 = scmp.eq.s32.totalorder %s20, 1
      %p106 = por %p104, %p105
      %p108 = scmp.ne.s32.totalorder %s93, %s107
      %p109 = scmp.eq.s32.totalorder %s20, 0
      %p110 = por %p108, %p109
      %s112 = sadd.s32 %s111, 1
      %p115 = scmp.eq.s32.totalorder %s14, 1
      %p116 = scmp.ne.s32.totalorder %s111, %s113
      %p117 = scmp.eq.s32.totalorder %s14, 0
      %p118 = por %p116, %p117
      %p119 = scmp.ne.s32.totalorder %s111, %s113
      %p120 = scmp.eq.s32.totalorder %s19, 1
      %p121 = por %p119, %p120
      %p122 = scmp.ne.s32.totalorder %s113, %s114
      %p123 = scmp.eq.s32.totalorder %s19, 0
      %p124 = por %p122, %p123
      %p125 = scmp.ne.s32.totalorder %s113, %s114
      %p126 = scmp.eq.s32.totalorder %s20, 1
      %p127 = por %p125, %p126
      %p129 = scmp.ne.s32.totalorder %s114, %s128
      %p130 = scmp.eq.s32.totalorder %s20, 0
      %p131 = por %p129, %p130
      %s132 = ssub.s32 %s14, %s21
      %p133 = scmp.eq.s32.totalorder %s132, 0
      %s135 = sadd.s32 %s134, 1
      %s136 = scalar_select %p133, %s134, %s135
      %p139 = pneg %p133
      %p140 = scmp.eq.s32.totalorder %s14, 1
      %p141 = por %p139, %p140
      %p142 = scmp.ne.s32.totalorder %s134, %s137
      %p143 = scmp.eq.s32.totalorder %s14, 0
      %p144 = por %p142, %p143
      %p145 = scmp.ne.s32.totalorder %s134, %s137
      %p146 = scmp.eq.s32.totalorder %s19, 1
      %p147 = por %p145, %p146
      %p148 = scmp.ne.s32.totalorder %s137, %s138
      %p149 = scmp.eq.s32.totalorder %s19, 0
      %p150 = por %p148, %p149
      %p151 = scmp.ne.s32.totalorder %s137, %s138
      %p152 = scmp.eq.s32.totalorder %s20, 1
      %p153 = por %p151, %p152
      %p155 = scmp.ne.s32.totalorder %s138, %s154
      %p156 = scmp.eq.s32.totalorder %s20, 0
      %p157 = por %p155, %p156
      %p158 = scmp.le.s32.totalorder 1, %s14
      %p159 = scmp.lt.s32.totalorder %s14, 3
      %p160 = pnand %p158, %p159
      %p161 = pneg %p160
      // Predicated region
      $region9: #{tpu_custom_call.1} parent=5 // pred_check
        _
      $region10: #{tpu_custom_call.1} parent=5 // pred_check_branch
        %163 = sbr.rel (%p160) target = $region12
      $region11: #{tpu_custom_call.1} parent=5 // pred_region
        %s164 = ssub.s32 %s14, 1
        // Predicated region
        $region13: #{tpu_custom_call.1} parent=11 // pred_check
          %p165 = pneg %p61
        $region14: #{tpu_custom_call.1} parent=11 // pred_check_branch
          %167 = sbr.rel (%p165) target = $region16
        $region15: #{tpu_custom_call.1} parent=11 // pred_region
          _
        $region16: #{tpu_custom_call.1} parent=11 // pred_fallthru
          _
        // Predicated region
        $region17: #{tpu_custom_call.1} parent=11 // pred_check
          %p168 = pneg %p82
        $region18: #{tpu_custom_call.1} parent=11 // pred_check_branch
          %170 = sbr.rel (%p168) target = $region20
        $region19: #{tpu_custom_call.1} parent=11 // pred_region
          _
        $region20: #{tpu_custom_call.1} parent=11 // pred_fallthru
          _
        // Predicated region
        $region21: #{tpu_custom_call.1} parent=11 // pred_check
          %p171 = pneg %p103
        $region22: #{tpu_custom_call.1} parent=11 // pred_check_branch
          %173 = sbr.rel (%p171) target = $region24
        $region23: #{tpu_custom_call.1} parent=11 // pred_region
          _
        $region24: #{tpu_custom_call.1} parent=11 // pred_fallthru
          _
        // Predicated region
        $region25: #{tpu_custom_call.1} parent=11 // pred_check
          %p174 = pneg %p124
        $region26: #{tpu_custom_call.1} parent=11 // pred_check_branch
          %176 = sbr.rel (%p174) target = $region28
        $region27: #{tpu_custom_call.1} parent=11 // pred_region
          _
        $region28: #{tpu_custom_call.1} parent=11 // pred_fallthru
          _
      $region12: #{tpu_custom_call.1} parent=5 // pred_fallthru
        _
      %p177 = scmp.lt.s32.totalorder %s14, 2
      // Predicated region
      $region29: #{tpu_custom_call.1} parent=5 // pred_check
        %p178 = pneg %p177
      $region30: #{tpu_custom_call.1} parent=5 // pred_check_branch
        %180 = sbr.rel (%p178) target = $region32
      $region31: #{tpu_custom_call.1} parent=5 // pred_region
        // Predicated region
        $region33: #{tpu_custom_call.1} parent=31 // pred_check
          %p181 = pneg %p34
        $region34: #{tpu_custom_call.1} parent=31 // pred_check_branch
          %183 = sbr.rel (%p181) target = $region36
        $region35: #{tpu_custom_call.1} parent=31 // pred_region
          %s184 = smul.u32 16, %s14
          %p185 = scmp.lt.s32.totalorder %s184, 31
          %s186 = scalar_select %p185, %s184, 31
          %s187 = smul.addr %s186, 8
          %s188 = scalar_lea.vmem %s0, %s187
          %s189 = smul.u32 16, %s14
        $region36: #{tpu_custom_call.1} parent=31 // pred_fallthru
          _
      $region32: #{tpu_custom_call.1} parent=5 // pred_fallthru
        _
      %p190 = scmp.le.s32.totalorder 1, %s14
      %p191 = scmp.lt.s32.totalorder %s14, 3
      %p192 = pnand %p190, %p191
      %p193 = pneg %p192
      // Predicated region
      $region37: #{tpu_custom_call.1} parent=5 // pred_check
        _
      $region38: #{tpu_custom_call.1} parent=5 // pred_check_branch
        %195 = sbr.rel (%p192) target = $region40
      $region39: #{tpu_custom_call.1} parent=5 // pred_region
        %s196 = ssub.s32 %s14, 1
        %s197 = smul.u32 16, %s19
        %p198 = scmp.lt.s32.totalorder %s197, 31
        %s199 = scalar_select %p198, %s197, 31
        %s200 = smul.addr %s199, 8
        %s201 = scalar_lea.vmem %s0, %s200
        %p202 = pneg %p40
        %p203 = pneg %p37
        %p204 = pneg %p61
        %p205 = pneg %p58
        %p206 = pneg %p82
        %p207 = pneg %p79
        %p208 = pneg %p103
        %p209 = pneg %p100
        %p210 = pneg %p124
        %p211 = pneg %p121
        %p212 = pneg %p150
        %p213 = pneg %p147
        %s214 = sand.u32 %s137, 1
        %s215 = scalar_lea.sflag [#allocation3], %s214
        %s216 = sand.u32 %s137, 1
        %s217 = smul.addr %s216, 128
        %s218 = scalar_lea.vmem [#allocation2], %s217
        %s219 = smul.u32 16, %s19
        %p220 = scmp.lt.s32.totalorder %s219, 31
        %s221 = scalar_select %p220, %s219, 31
        %s222 = smul.addr %s221, 8
        %s223 = scalar_lea.vmem %s0, %s222
        %s224 = smul.u32 16, %s19
        %s225 = smul.u32 16, %s19
        %v227 = vld [vmem:[%s223] sm:$0xff]
        %v228 = vld [vmem:[%s223 + $0x8] sm:$0xff]
        %v229 = vld [vmem:[%s223 + $0x10] sm:$0xff]
        %v230 = vld [vmem:[%s223 + $0x18] sm:$0xff]
        %v231 = vld [vmem:[%s223 + $0x20] sm:$0xff]
        %v232 = vld [vmem:[%s223 + $0x28] sm:$0xff]
        %v233 = vld [vmem:[%s223 + $0x30] sm:$0xff]
        %v234 = vld [vmem:[%s223 + $0x38] sm:$0xff]
        %v235 = vld [vmem:[%s223 + $0x40] sm:$0xff]
        %v236 = vld [vmem:[%s223 + $0x48] sm:$0xff]
        %v237 = vld [vmem:[%s223 + $0x50] sm:$0xff]
        %v238 = vld [vmem:[%s223 + $0x58] sm:$0xff]
        %v239 = vld [vmem:[%s223 + $0x60] sm:$0xff]
        %v240 = vld [vmem:[%s223 + $0x68] sm:$0xff]
        %v241 = vld [vmem:[%s223 + $0x70] sm:$0xff]
        %v242 = vld [vmem:[%s223 + $0x78] sm:$0xff]
        %v243 = vpack.c.bf16 %v228, %v227
        %v244 = vpack.c.bf16 %v230, %v229
        %v245 = vpack.c.bf16 %v232, %v231
        %v246 = vpack.c.bf16 %v234, %v233
        %v247 = vpack.c.bf16 %v236, %v235
        %v248 = vpack.c.bf16 %v238, %v237
        %v249 = vpack.c.bf16 %v240, %v239
        %v250 = vpack.c.bf16 %v242, %v241
        %v251 = vld [vmem:[%s1] sm:$0x3]
        %v252 = vld [vmem:[%s4] sm:$0x1]
        %v253 = vunpack.c.l.bf16 %v252
        %v254 = vlaneseq
        %v255 = vshrl.u32 %v254, 7
        %v256 = vsub.s32 0, %v255
        %v257 = vrot.slane %v253, %v256
        %vm258 = vcmask 31744
        %v260 = vsel %vm258, %v243, 0
        %v263 = vsel %vm258, %v244, 0
        %v266 = vsel %vm258, %v245, 0
        %v269 = vsel %vm258, %v246, 0
        %v272 = vsel %vm258, %v247, 0
        %v275 = vsel %vm258, %v248, 0
        %v278 = vsel %vm258, %v249, 0
        %v281 = vsel %vm258, %v250, 0
        %vm283 = vcmask 1041408
        %v285 = vsel %vm283, %v251, 0
        %287 = vmatprep.subr.bf16.mxu0 0
        %288 = vmatpush1.bf16.msra.mxu0 0
        %289 = vmatprep.subr.bf16.mxu0 0
        %290 = vmatpush1.bf16.msra.mxu0 0
        %291 = vmatprep.subr.bf16.mxu0 0
        %292 = vmatpush1.bf16.msra.mxu0 0
        %293 = vmatprep.subr.bf16.mxu0 0
        %294 = vmatpush1.bf16.msra.mxu0 0
        %295 = vmatprep.subr.bf16.mxu0 0
        %296 = vmatpush1.bf16.msra.mxu0 0
        %297 = vmatprep.subr.bf16.mxu0 0
        %298 = vmatpush1.bf16.msra.mxu0 0
        %299 = vmatprep.subr.bf16.mxu0 0
        %300 = vmatpush1.bf16.msra.mxu0 0
        %301 = vmatprep.subr.bf16.mxu0 0
        %302 = vmatpush1.bf16.msra.mxu0 %v285
        %303 = vmatprep.subr.bf16.mxu0 0
        %304 = vmatpush2.bf16.msra.mxu0 0
        %305 = vmatprep.subr.bf16.mxu0 0
        %306 = vmatpush2.bf16.msra.mxu0 0
        %307 = vmatprep.subr.bf16.mxu0 0
        %308 = vmatpush2.bf16.msra.mxu0 0
        %309 = vmatprep.subr.bf16.mxu0 0
        %310 = vmatpush2.bf16.msra.mxu0 0
        %311 = vmatprep.subr.bf16.mxu0 0
        %312 = vmatpush2.bf16.msra.mxu0 0
        %313 = vmatprep.subr.bf16.mxu0 0
        %314 = vmatpush2.bf16.msra.mxu0 0
        %315 = vmatprep.subr.bf16.mxu0 0
        %316 = vmatpush2.bf16.msra.mxu0 0
        %317 = vmatprep.subr.bf16.mxu0 0
        %318 = vmatpush2.bf16.msra.mxu0 0
        %319 = vmatprep.mubr.bf16.mxu0 0
        %320 = vmatmul.mubr.bf16.gmra.mxu0 %v260
        %v321 = vpop.f32.mrf.mxu0
        %v322 = vadd.f32 %v257, %v321
        %v323 = vpop.f32.mrf.mxu0
        %v324 = vpop.f32.mrf.mxu0
        %v325 = vadd.f32 %v257, %v324
        %v326 = vpop.f32.mrf.mxu0
        %327 = vmatprep.mubr.bf16.mxu0 0
        %328 = vmatmul.mubr.bf16.gmra.mxu0 %v263
        %v329 = vpop.f32.mrf.mxu0
        %v330 = vadd.f32 %v257, %v329
        %v331 = vpop.f32.mrf.mxu0
        %v332 = vpop.f32.mrf.mxu0
        %v333 = vadd.f32 %v257, %v332
        %v334 = vpop.f32.mrf.mxu0
        %335 = vmatprep.mubr.bf16.mxu0 0
        %336 = vmatmul.mubr.bf16.gmra.mxu0 %v266
        %v337 = vpop.f32.mrf.mxu0
        %v338 = vadd.f32 %v257, %v337
        %v339 = vpop.f32.mrf.mxu0
        %v340 = vpop.f32.mrf.mxu0
        %v341 = vadd.f32 %v257, %v340
        %v342 = vpop.f32.mrf.mxu0
        %343 = vmatprep.mubr.bf16.mxu0 0
        %344 = vmatmul.mubr.bf16.gmra.mxu0 %v269
        %v345 = vpop.f32.mrf.mxu0
        %v346 = vadd.f32 %v257, %v345
        %v347 = vpop.f32.mrf.mxu0
        %v348 = vpop.f32.mrf.mxu0
        %v349 = vadd.f32 %v257, %v348
        %v350 = vpop.f32.mrf.mxu0
        %351 = vmatprep.mubr.bf16.mxu0 0
        %352 = vmatmul.mubr.bf16.gmra.mxu0 %v272
        %v353 = vpop.f32.mrf.mxu0
        %v354 = vadd.f32 %v257, %v353
        %v355 = vpop.f32.mrf.mxu0
        %v356 = vpop.f32.mrf.mxu0
        %v357 = vadd.f32 %v257, %v356
        %v358 = vpop.f32.mrf.mxu0
        %359 = vmatprep.mubr.bf16.mxu0 0
        %360 = vmatmul.mubr.bf16.gmra.mxu0 %v275
        %v361 = vpop.f32.mrf.mxu0
        %v362 = vadd.f32 %v257, %v361
        %v363 = vpop.f32.mrf.mxu0
        %v364 = vpop.f32.mrf.mxu0
        %v365 = vadd.f32 %v257, %v364
        %v366 = vpop.f32.mrf.mxu0
        %367 = vmatprep.mubr.bf16.mxu0 0
        %368 = vmatmul.mubr.bf16.gmra.mxu0 %v278
        %v369 = vpop.f32.mrf.mxu0
        %v370 = vadd.f32 %v257, %v369
        %v371 = vpop.f32.mrf.mxu0
        %v372 = vpop.f32.mrf.mxu0
        %v373 = vadd.f32 %v257, %v372
        %v374 = vpop.f32.mrf.mxu0
        %375 = vmatprep.mubr.bf16.mxu0 0
        %376 = vmatmul.mubr.bf16.gmra.mxu0 %v281
        %v377 = vpop.f32.mrf.mxu0
        %v378 = vadd.f32 %v257, %v377
        %v379 = vpop.f32.mrf.mxu0
        %v380 = vpop.f32.mrf.mxu0
        %v381 = vadd.f32 %v257, %v380
        %v382 = vpop.f32.mrf.mxu0
        %383 = vdwg.mxu0
        %v384 = vmax.f32 %v322, 0.0
        %v385 = vmax.f32 %v325, 0.0
        %v386 = vmax.f32 %v330, 0.0
        %v387 = vmax.f32 %v333, 0.0
        %v388 = vmax.f32 %v338, 0.0
        %v389 = vmax.f32 %v341, 0.0
        %v390 = vmax.f32 %v346, 0.0
        %v391 = vmax.f32 %v349, 0.0
        %v392 = vmax.f32 %v354, 0.0
        %v393 = vmax.f32 %v357, 0.0
        %v394 = vmax.f32 %v362, 0.0
        %v395 = vmax.f32 %v365, 0.0
        %v396 = vmax.f32 %v370, 0.0
        %v397 = vmax.f32 %v373, 0.0
        %v398 = vmax.f32 %v378, 0.0
        %v399 = vmax.f32 %v381, 0.0
        %v400 = vpack.c.bf16 %v385, %v384
        %v401 = vpack.c.bf16 %v387, %v386
        %v402 = vpack.c.bf16 %v389, %v388
        %v403 = vpack.c.bf16 %v391, %v390
        %v404 = vpack.c.bf16 %v393, %v392
        %v405 = vpack.c.bf16 %v395, %v394
        %v406 = vpack.c.bf16 %v397, %v396
        %v407 = vpack.c.bf16 %v399, %v398
        %v408 = vld [vmem:[%s2] sm:$0xf]
        %v409 = vld [vmem:[%s2 + $0x4] sm:$0xf]
        %v410 = vld [vmem:[%s2 + $0x8] sm:$0xf]
        %v411 = vld [vmem:[%s2 + $0xc] sm:$0xf]
        %v412 = vld [vmem:[%s2 + $0x10] sm:$0xf]
        %v413 = vld [vmem:[%s2 + $0x14] sm:$0xf]
        %v414 = vld [vmem:[%s2 + $0x18] sm:$0xf]
        %v415 = vld [vmem:[%s2 + $0x1c] sm:$0xf]
        %v416 = vld [vmem:[%s2 + $0x20] sm:$0xf]
        %v417 = vld [vmem:[%s2 + $0x24] sm:$0xf]
        %v418 = vld [vmem:[%s2 + $0x28] sm:$0xf]
        %v419 = vld [vmem:[%s2 + $0x2c] sm:$0xf]
        %v420 = vld [vmem:[%s2 + $0x30] sm:$0xf]
        %v421 = vld [vmem:[%s2 + $0x34] sm:$0xf]
        %v422 = vld [vmem:[%s2 + $0x38] sm:$0xf]
        %v423 = vld [vmem:[%s2 + $0x3c] sm:$0xf]
        %v424 = vlaneseq
        %v425 = vshrl.u32 %v424, 7
        %v426 = vsub.s32 1, %v425
        %v427 = vrot.slane %v253, %v426
        %v444 = vunpack.c.l.b16 %v408
        %v445 = vunpack.c.l.b16 %v409
        %v446 = vunpack.c.l.b16 %v410
        %v447 = vunpack.c.l.b16 %v411
        %v448 = vunpack.c.l.b16 %v412
        %v449 = vunpack.c.l.b16 %v413
        %v450 = vunpack.c.l.b16 %v414
        %v451 = vunpack.c.l.b16 %v415
        %v452 = vunpack.c.l.b16 %v416
        %v453 = vunpack.c.l.b16 %v417
        %v454 = vunpack.c.l.b16 %v418
        %v455 = vunpack.c.l.b16 %v419
        %v456 = vunpack.c.l.b16 %v420
        %v457 = vunpack.c.l.b16 %v421
        %v458 = vunpack.c.l.b16 %v422
        %v459 = vunpack.c.l.b16 %v423
        %v460 = vpack.c.b16 %v445, %v444
        %v461 = vpack.c.b16 %v447, %v446
        %v462 = vpack.c.b16 %v449, %v448
        %v463 = vpack.c.b16 %v451, %v450
        %v464 = vpack.c.b16 %v453, %v452
        %v465 = vpack.c.b16 %v455, %v454
        %v466 = vpack.c.b16 %v457, %v456
        %v467 = vpack.c.b16 %v459, %v458
        %476 = vmatprep.subr.bf16.mxu0 0
        %477 = vmatpush1.bf16.msra.mxu0 %v467
        %478 = vmatprep.subr.bf16.mxu0 0
        %479 = vmatpush1.bf16.msra.mxu0 %v466
        %480 = vmatprep.subr.bf16.mxu0 0
        %481 = vmatpush1.bf16.msra.mxu0 %v465
        %482 = vmatprep.subr.bf16.mxu0 0
        %483 = vmatpush1.bf16.msra.mxu0 %v464
        %484 = vmatprep.subr.bf16.mxu0 0
        %485 = vmatpush1.bf16.msra.mxu0 %v463
        %486 = vmatprep.subr.bf16.mxu0 0
        %487 = vmatpush1.bf16.msra.mxu0 %v462
        %488 = vmatprep.subr.bf16.mxu0 0
        %489 = vmatpush1.bf16.msra.mxu0 %v461
        %490 = vmatprep.subr.bf16.mxu0 0
        %491 = vmatpush1.bf16.msra.mxu0 %v460
        %492 = vmatprep.subr.bf16.mxu0 0
        %493 = vmatpush2.bf16.msra.mxu0 0
        %494 = vmatprep.subr.bf16.mxu0 0
        %495 = vmatpush2.bf16.msra.mxu0 0
        %496 = vmatprep.subr.bf16.mxu0 0
        %497 = vmatpush2.bf16.msra.mxu0 0
        %498 = vmatprep.subr.bf16.mxu0 0
        %499 = vmatpush2.bf16.msra.mxu0 0
        %500 = vmatprep.subr.bf16.mxu0 0
        %501 = vmatpush2.bf16.msra.mxu0 0
        %502 = vmatprep.subr.bf16.mxu0 0
        %503 = vmatpush2.bf16.msra.mxu0 0
        %504 = vmatprep.subr.bf16.mxu0 0
        %505 = vmatpush2.bf16.msra.mxu0 0
        %506 = vmatprep.subr.bf16.mxu0 0
        %507 = vmatpush2.bf16.msra.mxu0 0
        %508 = vmatprep.mubr.bf16.mxu0 0
        %509 = vmatmul.mubr.bf16.gmra.mxu0 %v400
        %v510 = vpop.f32.mrf.mxu0
        %v511 = vadd.f32 %v427, %v510
        %v512 = vpop.f32.mrf.mxu0
        %v513 = vpop.f32.mrf.mxu0
        %v514 = vadd.f32 %v427, %v513
        %v515 = vpop.f32.mrf.mxu0
        %516 = vmatprep.mubr.bf16.mxu0 0
        %517 = vmatmul.mubr.bf16.gmra.mxu0 %v401
        %v518 = vpop.f32.mrf.mxu0
        %v519 = vadd.f32 %v427, %v518
        %v520 = vpop.f32.mrf.mxu0
        %v521 = vpop.f32.mrf.mxu0
        %v522 = vadd.f32 %v427, %v521
        %v523 = vpop.f32.mrf.mxu0
        %524 = vmatprep.mubr.bf16.mxu0 0
        %525 = vmatmul.mubr.bf16.gmra.mxu0 %v402
        %v526 = vpop.f32.mrf.mxu0
        %v527 = vadd.f32 %v427, %v526
        %v528 = vpop.f32.mrf.mxu0
        %v529 = vpop.f32.mrf.mxu0
        %v530 = vadd.f32 %v427, %v529
        %v531 = vpop.f32.mrf.mxu0
        %532 = vmatprep.mubr.bf16.mxu0 0
        %533 = vmatmul.mubr.bf16.gmra.mxu0 %v403
        %v534 = vpop.f32.mrf.mxu0
        %v535 = vadd.f32 %v427, %v534
        %v536 = vpop.f32.mrf.mxu0
        %v537 = vpop.f32.mrf.mxu0
        %v538 = vadd.f32 %v427, %v537
        %v539 = vpop.f32.mrf.mxu0
        %540 = vmatprep.mubr.bf16.mxu0 0
        %541 = vmatmul.mubr.bf16.gmra.mxu0 %v404
        %v542 = vpop.f32.mrf.mxu0
        %v543 = vadd.f32 %v427, %v542
        %v544 = vpop.f32.mrf.mxu0
        %v545 = vpop.f32.mrf.mxu0
        %v546 = vadd.f32 %v427, %v545
        %v547 = vpop.f32.mrf.mxu0
        %548 = vmatprep.mubr.bf16.mxu0 0
        %549 = vmatmul.mubr.bf16.gmra.mxu0 %v405
        %v550 = vpop.f32.mrf.mxu0
        %v551 = vadd.f32 %v427, %v550
        %v552 = vpop.f32.mrf.mxu0
        %v553 = vpop.f32.mrf.mxu0
        %v554 = vadd.f32 %v427, %v553
        %v555 = vpop.f32.mrf.mxu0
        %556 = vmatprep.mubr.bf16.mxu0 0
        %557 = vmatmul.mubr.bf16.gmra.mxu0 %v406
        %v558 = vpop.f32.mrf.mxu0
        %v559 = vadd.f32 %v427, %v558
        %v560 = vpop.f32.mrf.mxu0
        %v561 = vpop.f32.mrf.mxu0
        %v562 = vadd.f32 %v427, %v561
        %v563 = vpop.f32.mrf.mxu0
        %564 = vmatprep.mubr.bf16.mxu0 0
        %565 = vmatmul.mubr.bf16.gmra.mxu0 %v407
        %v566 = vpop.f32.mrf.mxu0
        %v567 = vadd.f32 %v427, %v566
        %v568 = vpop.f32.mrf.mxu0
        %v569 = vpop.f32.mrf.mxu0
        %v570 = vadd.f32 %v427, %v569
        %v571 = vpop.f32.mrf.mxu0
        %572 = vdwg.mxu0
        %v573 = vmax.f32 %v511, 0.0
        %v574 = vmax.f32 %v514, 0.0
        %v575 = vmax.f32 %v519, 0.0
        %v576 = vmax.f32 %v522, 0.0
        %v577 = vmax.f32 %v527, 0.0
        %v578 = vmax.f32 %v530, 0.0
        %v579 = vmax.f32 %v535, 0.0
        %v580 = vmax.f32 %v538, 0.0
        %v581 = vmax.f32 %v543, 0.0
        %v582 = vmax.f32 %v546, 0.0
        %v583 = vmax.f32 %v551, 0.0
        %v584 = vmax.f32 %v554, 0.0
        %v585 = vmax.f32 %v559, 0.0
        %v586 = vmax.f32 %v562, 0.0
        %v587 = vmax.f32 %v567, 0.0
        %v588 = vmax.f32 %v570, 0.0
        %v589 = vpack.c.bf16 %v574, %v573
        %v590 = vpack.c.bf16 %v576, %v575
        %v591 = vpack.c.bf16 %v578, %v577
        %v592 = vpack.c.bf16 %v580, %v579
        %v593 = vpack.c.bf16 %v582, %v581
        %v594 = vpack.c.bf16 %v584, %v583
        %v595 = vpack.c.bf16 %v586, %v585
        %v596 = vpack.c.bf16 %v588, %v587
        %v597 = vld [vmem:[%s3] sm:$0xf]
        %v598 = vld [vmem:[%s3 + $0x4] sm:$0xf]
        %v599 = vld [vmem:[%s3 + $0x8] sm:$0xf]
        %v600 = vld [vmem:[%s3 + $0xc] sm:$0xf]
        %v601 = vld [vmem:[%s3 + $0x10] sm:$0xf]
        %v602 = vld [vmem:[%s3 + $0x14] sm:$0xf]
        %v603 = vld [vmem:[%s3 + $0x18] sm:$0xf]
        %v604 = vld [vmem:[%s3 + $0x1c] sm:$0xf]
        %v605 = vld [vmem:[%s3 + $0x20] sm:$0xf]
        %v606 = vld [vmem:[%s3 + $0x24] sm:$0xf]
        %v607 = vld [vmem:[%s3 + $0x28] sm:$0xf]
        %v608 = vld [vmem:[%s3 + $0x2c] sm:$0xf]
        %v609 = vld [vmem:[%s3 + $0x30] sm:$0xf]
        %v610 = vld [vmem:[%s3 + $0x34] sm:$0xf]
        %v611 = vld [vmem:[%s3 + $0x38] sm:$0xf]
        %v612 = vld [vmem:[%s3 + $0x3c] sm:$0xf]
        %v613 = vld [vmem:[%s4] sm:$0x2]
        %v614 = vunpack.c.l.bf16 %v613
        %v615 = vlaneseq
        %v616 = vshrl.u32 %v615, 7
        %v617 = vsub.s32 2, %v616
        %v618 = vrot.slane %v614, %v617
        %v635 = vunpack.c.l.b16 %v597
        %v636 = vunpack.c.l.b16 %v598
        %v637 = vunpack.c.l.b16 %v599
        %v638 = vunpack.c.l.b16 %v600
        %v639 = vunpack.c.l.b16 %v601
        %v640 = vunpack.c.l.b16 %v602
        %v641 = vunpack.c.l.b16 %v603
        %v642 = vunpack.c.l.b16 %v604
        %v643 = vunpack.c.l.b16 %v605
        %v644 = vunpack.c.l.b16 %v606
        %v645 = vunpack.c.l.b16 %v607
        %v646 = vunpack.c.l.b16 %v608
        %v647 = vunpack.c.l.b16 %v609
        %v648 = vunpack.c.l.b16 %v610
        %v649 = vunpack.c.l.b16 %v611
        %v650 = vunpack.c.l.b16 %v612
        %v651 = vpack.c.b16 %v636, %v635
        %v652 = vpack.c.b16 %v638, %v637
        %v653 = vpack.c.b16 %v640, %v639
        %v654 = vpack.c.b16 %v642, %v641
        %v655 = vpack.c.b16 %v644, %v643
        %v656 = vpack.c.b16 %v646, %v645
        %v657 = vpack.c.b16 %v648, %v647
        %v658 = vpack.c.b16 %v650, %v649
        %667 = vmatprep.subr.bf16.mxu0 0
        %668 = vmatpush1.bf16.msra.mxu0 %v658
        %669 = vmatprep.subr.bf16.mxu0 0
        %670 = vmatpush1.bf16.msra.mxu0 %v657
        %671 = vmatprep.subr.bf16.mxu0 0
        %672 = vmatpush1.bf16.msra.mxu0 %v656
        %673 = vmatprep.subr.bf16.mxu0 0
        %674 = vmatpush1.bf16.msra.mxu0 %v655
        %675 = vmatprep.subr.bf16.mxu0 0
        %676 = vmatpush1.bf16.msra.mxu0 %v654
        %677 = vmatprep.subr.bf16.mxu0 0
        %678 = vmatpush1.bf16.msra.mxu0 %v653
        %679 = vmatprep.subr.bf16.mxu0 0
        %680 = vmatpush1.bf16.msra.mxu0 %v652
        %681 = vmatprep.subr.bf16.mxu0 0
        %682 = vmatpush1.bf16.msra.mxu0 %v651
        %683 = vmatprep.subr.bf16.mxu0 0
        %684 = vmatpush2.bf16.msra.mxu0 0
        %685 = vmatprep.subr.bf16.mxu0 0
        %686 = vmatpush2.bf16.msra.mxu0 0
        %687 = vmatprep.subr.bf16.mxu0 0
        %688 = vmatpush2.bf16.msra.mxu0 0
        %689 = vmatprep.subr.bf16.mxu0 0
        %690 = vmatpush2.bf16.msra.mxu0 0
        %691 = vmatprep.subr.bf16.mxu0 0
        %692 = vmatpush2.bf16.msra.mxu0 0
        %693 = vmatprep.subr.bf16.mxu0 0
        %694 = vmatpush2.bf16.msra.mxu0 0
        %695 = vmatprep.subr.bf16.mxu0 0
        %696 = vmatpush2.bf16.msra.mxu0 0
        %697 = vmatprep.subr.bf16.mxu0 0
        %698 = vmatpush2.bf16.msra.mxu0 0
        %699 = vmatprep.mubr.bf16.mxu0 0
        %700 = vmatmul.mubr.bf16.gmra.mxu0 %v589
        %v701 = vpop.f32.mrf.mxu0
        %v702 = vadd.f32 %v618, %v701
        %v703 = vpop.f32.mrf.mxu0
        %v704 = vpop.f32.mrf.mxu0
        %v705 = vadd.f32 %v618, %v704
        %v706 = vpop.f32.mrf.mxu0
        %707 = vmatprep.mubr.bf16.mxu0 0
        %708 = vmatmul.mubr.bf16.gmra.mxu0 %v590
        %v709 = vpop.f32.mrf.mxu0
        %v710 = vadd.f32 %v618, %v709
        %v711 = vpop.f32.mrf.mxu0
        %v712 = vpop.f32.mrf.mxu0
        %v713 = vadd.f32 %v618, %v712
        %v714 = vpop.f32.mrf.mxu0
        %715 = vmatprep.mubr.bf16.mxu0 0
        %716 = vmatmul.mubr.bf16.gmra.mxu0 %v591
        %v717 = vpop.f32.mrf.mxu0
        %v718 = vadd.f32 %v618, %v717
        %v719 = vpop.f32.mrf.mxu0
        %v720 = vpop.f32.mrf.mxu0
        %v721 = vadd.f32 %v618, %v720
        %v722 = vpop.f32.mrf.mxu0
        %723 = vmatprep.mubr.bf16.mxu0 0
        %724 = vmatmul.mubr.bf16.gmra.mxu0 %v592
        %v725 = vpop.f32.mrf.mxu0
        %v726 = vadd.f32 %v618, %v725
        %v727 = vpop.f32.mrf.mxu0
        %v728 = vpop.f32.mrf.mxu0
        %v729 = vadd.f32 %v618, %v728
        %v730 = vpop.f32.mrf.mxu0
        %731 = vmatprep.mubr.bf16.mxu0 0
        %732 = vmatmul.mubr.bf16.gmra.mxu0 %v593
        %v733 = vpop.f32.mrf.mxu0
        %v734 = vadd.f32 %v618, %v733
        %v735 = vpop.f32.mrf.mxu0
        %v736 = vpop.f32.mrf.mxu0
        %v737 = vadd.f32 %v618, %v736
        %v738 = vpop.f32.mrf.mxu0
        %739 = vmatprep.mubr.bf16.mxu0 0
        %740 = vmatmul.mubr.bf16.gmra.mxu0 %v594
        %v741 = vpop.f32.mrf.mxu0
        %v742 = vadd.f32 %v618, %v741
        %v743 = vpop.f32.mrf.mxu0
        %v744 = vpop.f32.mrf.mxu0
        %v745 = vadd.f32 %v618, %v744
        %v746 = vpop.f32.mrf.mxu0
        %747 = vmatprep.mubr.bf16.mxu0 0
        %748 = vmatmul.mubr.bf16.gmra.mxu0 %v595
        %v749 = vpop.f32.mrf.mxu0
        %v750 = vadd.f32 %v618, %v749
        %v751 = vpop.f32.mrf.mxu0
        %v752 = vpop.f32.mrf.mxu0
        %v753 = vadd.f32 %v618, %v752
        %v754 = vpop.f32.mrf.mxu0
        %755 = vmatprep.mubr.bf16.mxu0 0
        %756 = vmatmul.mubr.bf16.gmra.mxu0 %v596
        %v757 = vpop.f32.mrf.mxu0
        %v758 = vadd.f32 %v618, %v757
        %v759 = vpop.f32.mrf.mxu0
        %v760 = vpop.f32.mrf.mxu0
        %v761 = vadd.f32 %v618, %v760
        %v762 = vpop.f32.mrf.mxu0
        %763 = vdwg.mxu0
        %764 = vst [vmem:[%s218] sm:$0xff] %v702
        %765 = vst [vmem:[%s218 + $0x8] sm:$0xff] %v705
        %766 = vst [vmem:[%s218 + $0x10] sm:$0xff] %v710
        %767 = vst [vmem:[%s218 + $0x18] sm:$0xff] %v713
        %768 = vst [vmem:[%s218 + $0x20] sm:$0xff] %v718
        %769 = vst [vmem:[%s218 + $0x28] sm:$0xff] %v721
        %770 = vst [vmem:[%s218 + $0x30] sm:$0xff] %v726
        %771 = vst [vmem:[%s218 + $0x38] sm:$0xff] %v729
        %772 = vst [vmem:[%s218 + $0x40] sm:$0xff] %v734
        %773 = vst [vmem:[%s218 + $0x48] sm:$0xff] %v737
        %774 = vst [vmem:[%s218 + $0x50] sm:$0xff] %v742
        %775 = vst [vmem:[%s218 + $0x58] sm:$0xff] %v745
        %776 = vst [vmem:[%s218 + $0x60] sm:$0xff] %v750
        %777 = vst [vmem:[%s218 + $0x68] sm:$0xff] %v753
        %778 = vst [vmem:[%s218 + $0x70] sm:$0xff] %v758
        %779 = vst [vmem:[%s218 + $0x78] sm:$0xff] %v761
        %s780 = sand.u32 %s137, 1
        %s781 = scalar_lea.sflag [#allocation3], %s780
        %s782 = sand.u32 %s137, 1
        %s783 = smul.addr %s782, 128
        %s784 = scalar_lea.vmem [#allocation2], %s783
        // Predicated region
        $region41: #{tpu_custom_call.1} parent=39 // pred_check
          %p785 = pneg %p147
        $region42: #{tpu_custom_call.1} parent=39 // pred_check_branch
          %787 = sbr.rel (%p785) target = $region44
        $region43: #{tpu_custom_call.1} parent=39 // pred_region
          %s788 = smul.u32 16, %s19
          %s790 = ssub.s32 2048, 2048
          %791 = vsyncadd %s781, %s790
          %s792 = smul.addr %s788, 128
          %s793 = scalar_lea.hbm %s5, %s792
          %s794 = sshll.u32 %s784, 4
          %s795 = int_to_ptr.vmem [resolvable:$true] %s794
          %800 = dma.vmem_to_hbm [thread:$0]  %s795, 2048, %s793, %s781, 128, 128, 8
        $region44: #{tpu_custom_call.1} parent=39 // pred_fallthru
          _
      $region40: #{tpu_custom_call.1} parent=5 // pred_fallthru
        _
      %p801 = scmp.le.s32.totalorder 2, %s14
      // Predicated region
      $region45: #{tpu_custom_call.1} parent=5 // pred_check
        %p802 = pneg %p801
      $region46: #{tpu_custom_call.1} parent=5 // pred_check_branch
        %804 = sbr.rel (%p802) target = $region48
      $region47: #{tpu_custom_call.1} parent=5 // pred_region
        %s805 = ssub.s32 %s14, 2
        // Predicated region
        $region49: #{tpu_custom_call.1} parent=47 // pred_check
          %p806 = pneg %p153
        $region50: #{tpu_custom_call.1} parent=47 // pred_check_branch
          %808 = sbr.rel (%p806) target = $region52
        $region51: #{tpu_custom_call.1} parent=47 // pred_region
          %s809 = sand.u32 %s138, 1
          %s810 = scalar_lea.sflag [#allocation3], %s809
          %s811 = sand.u32 %s138, 1
          %s812 = smul.addr %s811, 128
          %s813 = scalar_lea.vmem [#allocation2], %s812
          %814 = dma.done %s810, 2048
        $region52: #{tpu_custom_call.1} parent=47 // pred_fallthru
          _
      $region48: #{tpu_custom_call.1} parent=5 // pred_fallthru
        _
    $region6: #{tpu_custom_call.1} parent=1 // loop_footer
      %s18 = sadd.s32 1, %s14
    $region7: #{tpu_custom_call.1} parent=1 // loop_footer_branch
      %13 = sbr.rel target = $region3
    $region8: #{tpu_custom_call.1} parent=1 // loop_exit
      _
    %815 = vsyncpa [#allocation3], 1
    %s816 = scalar_lea.sflag [#allocation3], 1
    %817 = vsyncpa %s816, 1

</llo_original>
